<compile_context>
chip_gen: v7x
topology: tpu7x:2x2x1
jax: 0.10.0
libtpu: 0.0.40
codegen_flags: <defaults>
</compile_context>

<pallas_src>
import functools

import jax
import jax.numpy as jnp
from jax.experimental import pallas as pl
from jax.experimental.pallas import tpu as pltpu


# ----------------------------- shared math (kernel body AND pure-JAX reference) --------

def _layer_norm(x, g, b, eps=1e-6):
    mu = jnp.mean(x, axis=-1, keepdims=True)
    var = jnp.mean(jnp.square(x - mu), axis=-1, keepdims=True)
    return (x - mu) * jax.lax.rsqrt(var + eps) * g + b


def _mm(x, w):
    """2-D matmul with bf16 operands (no-op cast if already bf16) and f32 accumulation."""
    return jnp.dot(x.astype(jnp.bfloat16), w.astype(jnp.bfloat16),
                   preferred_element_type=jnp.float32)


def _padded_rows(s_k, n_head):
    """Rows of the head-expanded K/V: H*Sk padded up to a lane-dense multiple of 128."""
    m = n_head * s_k
    m_pad = ((m + 127) // 128) * 128
    return m_pad if m_pad % s_k == 0 else m


def _attn_masks(s_k, d, n_head):
    """Layer-invariant masks for the fused multi-head attention (0/1 valued, exact in bf16).

    blk         (M, D): row m keeps only the lanes of head m // Sk (zero for padding rows).
    ones_blocks (M, M): 1 inside each Sk x Sk same-segment block -> every per-head softmax
                        denominator comes from a single matmul.
    """
    dh = d // n_head
    m = _padded_rows(s_k, n_head)
    row_head = jax.lax.broadcasted_iota(jnp.int32, (m, d), 0) // s_k
    col_head = jax.lax.broadcasted_iota(jnp.int32, (m, d), 1) // dh
    blk = (row_head == col_head).astype(jnp.bfloat16)
    seg_r = jax.lax.broadcasted_iota(jnp.int32, (m, m), 0) // s_k
    seg_c = jax.lax.broadcasted_iota(jnp.int32, (m, m), 1) // s_k
    ones_blocks = (seg_r == seg_c).astype(jnp.bfloat16)
    return blk, ones_blocks


def _attention(q, k, v, wo, bo, blk, ones_blocks, B, Sq, Sk, n_head, approx_recip):
    """Multi-head attention, every head in one fused pass (no per-head Python loop).

    q: (B*Sq, D) f32;  k, v: (B*Sk, D);  returns (B*Sq, D) f32.
    Heads stay in the lane dimension: K/V are replicated into a head-block-diagonal,
    zero-padded (lane-dense) bf16 form, so one batched matmul yields every head's scores,
    one exp pass + one block-ones matmul yields every per-head softmax denominator, and one
    batched matmul yields the per-head context already laid out as (B, Sq, D) for a single Wo.
    """
    D = q.shape[-1]
    dh = D // n_head
    M = blk.shape[0]                       # padded H*Sk (multiple of 128 when possible)
    R = M // Sk                            # replicas; replicas beyond n_head are masked to 0

    q3 = (q * (1.0 / (dh ** 0.5))).reshape(B, Sq, D).astype(jnp.bfloat16)
    k3 = k.reshape(B, Sk, D).astype(jnp.bfloat16)        # cast once, pre-replication
    v3 = v.reshape(B, Sk, D).astype(jnp.bfloat16)

    # Head-block-diagonal expansion, built directly in bf16 (pure MXU operands).
    k_big = jnp.concatenate([k3] * R, axis=1) * blk      # (B, M, D) bf16
    v_big = jnp.concatenate([v3] * R, axis=1) * blk      # (B, M, D) bf16

    s = jnp.einsum('bqd,bmd->bqm', q3, k_big,
                   preferred_element_type=jnp.float32)   # (B, Sq, M) f32
    # TODO(synk): shared-row max across heads is exact algebra, but a head whose logits sit
    # >~88 below another head's can underflow; a true segment max needs a lane relayout.
    s = s - jnp.max(s, axis=-1, keepdims=True)
    p = jnp.exp(s)                                       # f32 numerators

    # Per-head denominators via one matmul against the block-ones matrix (bf16 operands,
    # consistent with the bf16 numerators used in the context matmul below).
    denom = jnp.einsum('bqm,mn->bqn', p.astype(jnp.bfloat16), ones_blocks,
                       preferred_element_type=jnp.float32)
    denom = jnp.maximum(denom, 1e-30)
    if approx_recip:
        inv = pl.reciprocal(denom, approx=True)          # EUP slot, co-issues for free
    else:
        inv = 1.0 / denom
    p = p * inv

    ctx = jnp.einsum('bqm,bmd->bqd', p.astype(jnp.bfloat16), v_big,
                     preferred_element_type=jnp.float32).reshape(B * Sq, D)
    return _mm(ctx, wo) + bo                             # single output projection


def _decoder_layer(x, kv_c, get, blk_s, ones_s, blk_c, ones_c, B, n_head, approx_recip):
    """One post-norm decoder layer.

    x    : (B*Sd, D) f32 running hidden state (batch folded into the matmul rows).
    kv_c : (B*Se, 2D) pre-projected cross-attention K|V of the encoder memory.
    get(i): i-th per-layer parameter (original 20-parameter indexing; 8/9 -- the cross K/V
    projection -- are hoisted out of the layer and never requested).
    """
    D = x.shape[-1]
    Sd = x.shape[0] // B
    Se = kv_c.shape[0] // B

    # --- (unmasked) self attention: one packed QKV projection ---------------------------
    qkv = _mm(x, get(0)) + get(1)                        # (B*Sd, 3D)
    sa = _attention(qkv[:, :D], qkv[:, D:2 * D], qkv[:, 2 * D:], get(2), get(3),
                    blk_s, ones_s, B, Sd, Sd, n_head, approx_recip)
    x = _layer_norm(x + sa, get(4), get(5))

    # --- cross attention over conv_features (K/V projection hoisted out of the layer) ---
    q_c = _mm(x, get(6)) + get(7)                        # (B*Sd, D)
    ca = _attention(q_c, kv_c[:, :D], kv_c[:, D:], get(10), get(11),
                    blk_c, ones_c, B, Sd, Se, n_head, approx_recip)
    x = _layer_norm(x + ca, get(12), get(13))

    # --- position-wise feed forward -------------------------------------------------------
    f = jnp.maximum(_mm(x, get(14)) + get(15), 0.0)
    f = _mm(f, get(16)) + get(17)
    x = _layer_norm(x + f, get(18), get(19))
    return x


# ----------------------------- parameter slab layout ------------------------------------
# Original per-layer parameter indexing (mirrors the PyTorch layer's state):
#   0 W_qkv  1 b_qkv  2 Wo_sa  3 bo_sa  4 ln1_g  5 ln1_b
#   6 Wq_ca  7 bq_ca  8 Wkv_ca 9 b_kv  10 Wo_ca 11 bo_ca 12 ln2_g 13 ln2_b
#  14 W_ff1 15 b_ff1 16 W_ff2 17 b_ff2 18 ln3_g 19 ln3_b
_WA_IDS = (0, 2, 6, 10, 14)     # D-row weight matrices   -> one (D, 6D+F) bf16 slab
_WB_ID = 16                     # FFN down projection     -> its own (F, D) bf16 slab
_VEC_IDS = (1, 3, 4, 5, 7, 11, 12, 13, 15, 17, 18, 19)   # biases + LN -> (1, 13D+F) f32 slab
# ids 8/9 (cross K/V projection) are hoisted out of the kernel and pre-applied to the encoder.


def _slab_offsets(param_shapes, ids):
    """Column offsets {param_id: (start, stop)} for packing params along the last axis."""
    off, out = 0, {}
    for i in ids:
        w = param_shapes[i][-1]
        out[i] = (off, off + w)
        off += w
    return out, off


# ----------------------------- Pallas kernel (all layers fused) -------------------------

def _fused_decoder_kernel(n_head, wa_off, vec_off,
                          hid_ref, blk_s_ref, ones_s_ref, blk_c_ref, ones_c_ref,
                          wa_ref, wb_ref, vec_ref, kv_ref, out_ref):
    # Output block has a constant index_map -> stays VMEM-resident across the layer grid and
    # doubles as the running hidden state (no per-layer HBM round trip).
    @pl.when(pl.program_id(0) == 0)
    def _():
        out_ref[...] = hid_ref[...]

    B, Sd, D = out_ref.shape
    x = out_ref[...].reshape(B * Sd, D)

    def get(i):
        # Slice the coalesced slabs at static, lane-aligned offsets (load at point of use).
        if i == _WB_ID:
            return wb_ref[0]
        if i in wa_off:
            a, b = wa_off[i]
            return wa_ref[0, :, a:b]
        a, b = vec_off[i]
        return vec_ref[0, :, a:b]

    x_new = _decoder_layer(x, kv_ref[0], get,
                           blk_s_ref[...], ones_s_ref[...],
                           blk_c_ref[...], ones_c_ref[...],
                           B, n_head, approx_recip=True)
    out_ref[...] = x_new.reshape(B, Sd, D).astype(out_ref.dtype)


def sequential_transformer_decoder(conv_features, hidden_encoding, layer_params, n_head):
    """Mirrors _InternalSequentialTransformerDecoder.forward (all layers in one pallas_call)."""
    B, Sd, D = hidden_encoding.shape
    Se = conv_features.shape[1]
    num_layers = len(layer_params)
    shapes = [p.shape for p in layer_params[0]]
    F = shapes[14][-1]

    # ---- coalesce per-layer parameters into 3 slabs (weights stream in bf16) -------------
    wa_off, wa_width = _slab_offsets(shapes, _WA_IDS)
    vec_off, vec_width = _slab_offsets(shapes, _VEC_IDS)
    wa = jnp.stack([jnp.concatenate([lp[i] for i in _WA_IDS], axis=1)
                    for lp in layer_params]).astype(jnp.bfloat16)            # (L, D, 6D+F)
    wb = jnp.stack([lp[_WB_ID] for lp in layer_params]).astype(jnp.bfloat16)  # (L, F, D)
    vec = jnp.stack([jnp.concatenate([lp[i] for i in _VEC_IDS], axis=1)
                     for lp in layer_params]).astype(jnp.float32)            # (L, 1, 13D+F)

    # ---- hoist the layer-invariant cross-attention K/V projection out of the kernel ------
    # One wide matmul (N = 2D*L, much better MXU occupancy than a per-layer 2D-wide matmul);
    # the kernel then streams a small bf16 activation slab instead of the (D, 2D) weight.
    e = conv_features.reshape(B * Se, D)
    wkv_all = jnp.concatenate([lp[8] for lp in layer_params], axis=1)        # (D, 2D*L)
    bkv_all = jnp.concatenate([lp[9] for lp in layer_params], axis=1)        # (1, 2D*L)
    kv_all = _mm(e, wkv_all) + bkv_all
    kv_pre = jnp.stack(jnp.split(kv_all, num_layers, axis=1)).astype(jnp.bfloat16)  # (L,B*Se,2D)

    # ---- constant attention masks, built once and kept VMEM-resident ---------------------
    blk_s, ones_s = _attn_masks(Sd, D, n_head)
    blk_c, ones_c = _attn_masks(Se, D, n_head)
    Ms, Mc = blk_s.shape[0], blk_c.shape[0]

    grid_spec = pltpu.PrefetchScalarGridSpec(
        num_scalar_prefetch=0,
        grid=(num_layers,),
        in_specs=[
            pl.BlockSpec((B, Sd, D), lambda l: (0, 0, 0)),           # hidden (read at step 0)
            pl.BlockSpec((Ms, D), lambda l: (0, 0)),                 # blk_self    (constant)
            pl.BlockSpec((Ms, Ms), lambda l: (0, 0)),                # ones_self   (constant)
            pl.BlockSpec((Mc, D), lambda l: (0, 0)),                 # blk_cross   (constant)
            pl.BlockSpec((Mc, Mc), lambda l: (0, 0)),                # ones_cross  (constant)
            pl.BlockSpec((1, D, wa_width), lambda l: (l, 0, 0)),     # weight slab   (per layer)
            pl.BlockSpec((1, F, D), lambda l: (l, 0, 0)),            # FFN down-proj (per layer)
            pl.BlockSpec((1, 1, vec_width), lambda l: (l, 0, 0)),    # bias/LN slab  (per layer)
            pl.BlockSpec((1, B * Se, 2 * D), lambda l: (l, 0, 0)),   # cross K/V     (per layer)
        ],
        out_specs=pl.BlockSpec((B, Sd, D), lambda l: (0, 0, 0)),
    )
    # Layers are inherently sequential -> "arbitrary".
    # TODO(synk): on v7x (2 TensorCores) a leading "parallel" batch grid axis only pays once the
    #   kernel stops being weight-DMA bound (each core re-streams the weights); omitted here.
    # TODO(synk): at production widths (D>=1024, FFN>=4096) split the per-layer weight slab into
    #   sub-steps (extra grid axis over {QKV, Wo, FFN-in, FFN-out}) and set vmem_limit_bytes so
    #   only one slab + its prefetch is live, to fit v7x's 64 MiB VMEM; unnecessary at this size.
    # TODO(synk): if profiling on v5e still shows the weight DMA exposed, add
    #   pipeline_mode=pl.Buffered(3) to the per-layer slab BlockSpecs.
    return pl.pallas_call(
        functools.partial(_fused_decoder_kernel, n_head, wa_off, vec_off),
        out_shape=jax.ShapeDtypeStruct((B, Sd, D), jnp.float32),
        grid_spec=grid_spec,
        compiler_params=pltpu.CompilerParams(dimension_semantics=("arbitrary",)),
    )(hidden_encoding, blk_s, ones_s, blk_c, ones_c, wa, wb, vec, kv_pre)


# ----------------------------- pure-JAX reference ----------------------------------------

def reference_decoder(conv_features, hidden_encoding, layer_params, n_head):
    B, Sd, D = hidden_encoding.shape
    Se = conv_features.shape[1]
    blk_s, ones_s = _attn_masks(Sd, D, n_head)
    blk_c, ones_c = _attn_masks(Se, D, n_head)
    e = conv_features.reshape(B * Se, D)
    x = hidden_encoding.reshape(B * Sd, D)
    for params in layer_params:
        kv = _mm(e, params[8]) + params[9]               # per-layer cross K/V projection
        x = _decoder_layer(x, kv, lambda i, p=params: p[i],
                           blk_s, ones_s, blk_c, ones_c, B, n_head, approx_recip=False)
    return x.reshape(B, Sd, D)


# ----------------------------- deterministic parameter init ------------------------------

def init_layer_params(key, d, f):
    ks = jax.random.split(key, 14)

    def w(k, shape):
        return (jax.random.normal(k, shape) * (shape[0] ** -0.5)).astype(jnp.float32)

    def b(k, shape):
        return (0.02 * jax.random.normal(k, shape)).astype(jnp.float32)

    ones = lambda shape: jnp.ones(shape, jnp.float32)
    zeros = lambda shape: jnp.zeros(shape, jnp.float32)
    return (
        # self-attention: packed Wq|Wk|Wv, output proj, LayerNorm
        w(ks[0], (d, 3 * d)), b(ks[1], (1, 3 * d)),
        w(ks[2], (d, d)),     b(ks[3], (1, d)),
        ones((1, d)),         zeros((1, d)),
        # cross-attention: Wq, packed Wk|Wv, output proj, LayerNorm
        w(ks[4], (d, d)),     b(ks[5], (1, d)),
        w(ks[6], (d, 2 * d)), b(ks[7], (1, 2 * d)),
        w(ks[8], (d, d)),     b(ks[9], (1, d)),
        ones((1, d)),         zeros((1, d)),
        # position-wise FFN + LayerNorm
        w(ks[10], (d, f)),    b(ks[11], (1, f)),
        w(ks[12], (f, d)),    b(ks[13], (1, d)),
        ones((1, d)),         zeros((1, d)),
    )


# ----------------------------- main -------------------------------------------------------

if __name__ == "__main__":
    B, S_DEC, S_ENC = 2, 8, 16
    FEATURE_DIM, FFN_DIM, N_HEAD, NUM_LAYERS = 128, 256, 8, 2

    key = jax.random.PRNGKey(0)
    k_conv, k_hid, k_par = jax.random.split(key, 3)
    conv_features = jax.random.normal(k_conv, (B, S_ENC, FEATURE_DIM), dtype=jnp.float32)
    hidden_encoding = jax.random.normal(k_hid, (B, S_DEC, FEATURE_DIM), dtype=jnp.float32)
    layer_params = [init_layer_params(k, FEATURE_DIM, FFN_DIM)
                    for k in jax.random.split(k_par, NUM_LAYERS)]

    out = sequential_transformer_decoder(conv_features, hidden_encoding, layer_params, N_HEAD)
    out = jax.block_until_ready(out)

    ref = reference_decoder(conv_features, hidden_encoding, layer_params, N_HEAD)
    assert out.shape == (B, S_DEC, FEATURE_DIM), out.shape
    assert bool(jnp.all(jnp.isfinite(out)))
    max_err = float(jnp.max(jnp.abs(out - ref)))
    # Kernel and reference share identical bf16-at-the-MXU / f32-elementwise math and identical
    # masks; the only intentional divergence is the EUP approximate reciprocal in the softmax
    # normalization, hence the relaxed tolerance (real structural bugs give O(0.1..1) errors).
    assert jnp.allclose(out, ref, atol=2e-2, rtol=2e-2), f"max abs err {max_err}"

    print("KERNEL_OK")
</pallas_src>

<mosaic_0001>
module attributes {stable_mosaic.version = 11 : i64} {
  func.func @_fused_decoder_kernel(%arg0: i32, %arg1: memref<2x8x128xf32, #tpu.memory_space<vmem>>, %arg2: memref<128x128xbf16, #tpu.memory_space<vmem>>, %arg3: memref<128x128xbf16, #tpu.memory_space<vmem>>, %arg4: memref<128x128xbf16, #tpu.memory_space<vmem>>, %arg5: memref<128x128xbf16, #tpu.memory_space<vmem>>, %arg6: memref<1x128x1024xbf16, #tpu.memory_space<vmem>>, %arg7: memref<1x256x128xbf16, #tpu.memory_space<vmem>>, %arg8: memref<1x1x1920xf32, #tpu.memory_space<vmem>>, %arg9: memref<1x32x256xbf16, #tpu.memory_space<vmem>>, %arg10: memref<2x8x128xf32, #tpu.memory_space<vmem>>) attributes {dimension_semantics = [#tpu.dimension_semantics<arbitrary>], iteration_bounds = array<i64: 2>, scalar_prefetch = 0 : i64, scratch_operands = 0 : i64, tpu.core_type = #tpu.core_type<tc>, window_params = [{pipeline_mode = #tpu.pipeline_mode<synchronous>, transform_indices = @transform_0, window_bounds = array<i64: 2, 8, 128>}, {pipeline_mode = #tpu.pipeline_mode<synchronous>, transform_indices = @transform_1, window_bounds = array<i64: 128, 128>}, {pipeline_mode = #tpu.pipeline_mode<synchronous>, transform_indices = @transform_2, window_bounds = array<i64: 128, 128>}, {pipeline_mode = #tpu.pipeline_mode<synchronous>, transform_indices = @transform_3, window_bounds = array<i64: 128, 128>}, {pipeline_mode = #tpu.pipeline_mode<synchronous>, transform_indices = @transform_4, window_bounds = array<i64: 128, 128>}, {transform_indices = @transform_5, window_bounds = array<i64: 1, 128, 1024>}, {transform_indices = @transform_6, window_bounds = array<i64: 1, 256, 128>}, {transform_indices = @transform_7, window_bounds = array<i64: 1, 1, 1920>}, {transform_indices = @transform_8, window_bounds = array<i64: 1, 32, 256>}, {pipeline_mode = #tpu.pipeline_mode<synchronous>, transform_indices = @transform_9, window_bounds = array<i64: 2, 8, 128>}]} {
    %c0_i32 = arith.constant 0 : i32
    %0 = arith.cmpi eq, %arg0, %c0_i32 : i32
    %1 = arith.extui %0 : i1 to i32
    %c0_i32_0 = arith.constant 0 : i32
    %2 = arith.cmpi ne, %1, %c0_i32_0 : i32
    scf.if %2 {
      %c0_93 = arith.constant 0 : index
      %c0_94 = arith.constant 0 : index
      %c0_95 = arith.constant 0 : index
      %209 = vector.load %arg1[%c0_93, %c0_94, %c0_95] : memref<2x8x128xf32, #tpu.memory_space<vmem>>, vector<2x8x128xf32>
      %c0_96 = arith.constant 0 : index
      %c0_97 = arith.constant 0 : index
      %c0_98 = arith.constant 0 : index
      %210 = vector.load %arg10[%c0_96, %c0_97, %c0_98] : memref<2x8x128xf32, #tpu.memory_space<vmem>>, vector<2x8x128xf32>
      tpu.vector_store %arg10[%c0_96, %c0_97, %c0_98], %209 {strides = array<i32>} : memref<2x8x128xf32, #tpu.memory_space<vmem>>, vector<2x8x128xf32>,
    } else {
    }
    %c0 = arith.constant 0 : index
    %c0_1 = arith.constant 0 : index
    %c0_2 = arith.constant 0 : index
    %3 = vector.load %arg10[%c0, %c0_1, %c0_2] : memref<2x8x128xf32, #tpu.memory_space<vmem>>, vector<2x8x128xf32>
    %4 = vector.shape_cast %3 : vector<2x8x128xf32> to vector<16x128xf32>
    %c0_3 = arith.constant 0 : index
    %c0_4 = arith.constant 0 : index
    %c0_5 = arith.constant 0 : index
    %5 = vector.load %arg9[%c0_3, %c0_4, %c0_5] : memref<1x32x256xbf16, #tpu.memory_space<vmem>>, vector<1x32x256xbf16>
    %6 = vector.shape_cast %5 : vector<1x32x256xbf16> to vector<32x256xbf16>
    %c0_6 = arith.constant 0 : index
    %c0_7 = arith.constant 0 : index
    %7 = vector.load %arg2[%c0_6, %c0_7] : memref<128x128xbf16, #tpu.memory_space<vmem>>, vector<128x128xbf16>
    %c0_8 = arith.constant 0 : index
    %c0_9 = arith.constant 0 : index
    %8 = vector.load %arg3[%c0_8, %c0_9] : memref<128x128xbf16, #tpu.memory_space<vmem>>, vector<128x128xbf16>
    %c0_10 = arith.constant 0 : index
    %c0_11 = arith.constant 0 : index
    %9 = vector.load %arg4[%c0_10, %c0_11] : memref<128x128xbf16, #tpu.memory_space<vmem>>, vector<128x128xbf16>
    %c0_12 = arith.constant 0 : index
    %c0_13 = arith.constant 0 : index
    %10 = vector.load %arg5[%c0_12, %c0_13] : memref<128x128xbf16, #tpu.memory_space<vmem>>, vector<128x128xbf16>
    %c0_14 = arith.constant 0 : index
    %c0_15 = arith.constant 0 : index
    %c0_16 = arith.constant 0 : index
    %11 = vector.load %arg6[%c0_14, %c0_15, %c0_16] : memref<1x128x1024xbf16, #tpu.memory_space<vmem>>, vector<1x128x384xbf16>
    %12 = vector.shape_cast %11 : vector<1x128x384xbf16> to vector<128x384xbf16>
    %13 = arith.truncf %4 : vector<16x128xf32> to vector<16x128xbf16>
    %cst = arith.constant dense<0.000000e+00> : vector<16x384xf32>
    %14 = tpu.matmul %13, %12, %cst {dimension_numbers = #tpu.dot_dimension_numbers<[1], [0], [0], [1], [0, 0, 1, 1], [], []>} : vector<16x128xbf16>, vector<128x384xbf16>, vector<16x384xf32> -> vector<16x384xf32>
    %c0_17 = arith.constant 0 : index
    %c0_18 = arith.constant 0 : index
    %c0_19 = arith.constant 0 : index
    %15 = vector.load %arg8[%c0_17, %c0_18, %c0_19] : memref<1x1x1920xf32, #tpu.memory_space<vmem>>, vector<1x1x384xf32>
    %16 = vector.shape_cast %15 : vector<1x1x384xf32> to vector<1x384xf32>
    %17 = vector.broadcast %16 : vector<1x384xf32> to vector<16x384xf32>
    %18 = arith.addf %14, %17 : vector<16x384xf32>
    %19 = vector.extract_strided_slice %18 {offsets = [0, 0], sizes = [16, 128], strides = [1, 1]} : vector<16x384xf32> to vector<16x128xf32>
    %20 = vector.extract_strided_slice %18 {offsets = [0, 128], sizes = [16, 128], strides = [1, 1]} : vector<16x384xf32> to vector<16x128xf32>
    %21 = vector.extract_strided_slice %18 {offsets = [0, 256], sizes = [16, 128], strides = [1, 1]} : vector<16x384xf32> to vector<16x128xf32>
    %c0_20 = arith.constant 0 : index
    %c0_21 = arith.constant 0 : index
    %c384 = arith.constant 384 : index
    %22 = vector.load %arg6[%c0_20, %c0_21, %c384] : memref<1x128x1024xbf16, #tpu.memory_space<vmem>>, vector<1x128x128xbf16>
    %23 = vector.shape_cast %22 : vector<1x128x128xbf16> to vector<128x128xbf16>
    %c0_22 = arith.constant 0 : index
    %c0_23 = arith.constant 0 : index
    %c384_24 = arith.constant 384 : index
    %24 = vector.load %arg8[%c0_22, %c0_23, %c384_24] : memref<1x1x1920xf32, #tpu.memory_space<vmem>>, vector<1x1x128xf32>
    %25 = vector.shape_cast %24 : vector<1x1x128xf32> to vector<1x128xf32>
    %cst_25 = arith.constant 2.500000e-01 : f32
    %26 = vector.broadcast %cst_25 : f32 to vector<16x128xf32>
    %27 = arith.mulf %19, %26 : vector<16x128xf32>
    %28 = vector.shape_cast %27 : vector<16x128xf32> to vector<2x8x128xf32>
    %29 = arith.truncf %28 : vector<2x8x128xf32> to vector<2x8x128xbf16>
    %30 = vector.shape_cast %20 : vector<16x128xf32> to vector<2x8x128xf32>
    %31 = arith.truncf %30 : vector<2x8x128xf32> to vector<2x8x128xbf16>
    %32 = vector.shape_cast %21 : vector<16x128xf32> to vector<2x8x128xf32>
    %33 = arith.truncf %32 : vector<2x8x128xf32> to vector<2x8x128xbf16>
    %34 = tpu.concatenate %31, %31, %31, %31, %31, %31, %31, %31, %31, %31, %31, %31, %31, %31, %31, %31 in 1 : vector<2x8x128xbf16>, vector<2x8x128xbf16>, vector<2x8x128xbf16>, vector<2x8x128xbf16>, vector<2x8x128xbf16>, vector<2x8x128xbf16>, vector<2x8x128xbf16>, vector<2x8x128xbf16>, vector<2x8x128xbf16>, vector<2x8x128xbf16>, vector<2x8x128xbf16>, vector<2x8x128xbf16>, vector<2x8x128xbf16>, vector<2x8x128xbf16>, vector<2x8x128xbf16>, vector<2x8x128xbf16> -> vector<2x128x128xbf16>
    %35 = vector.shape_cast %7 : vector<128x128xbf16> to vector<1x128x128xbf16>
    %36 = vector.broadcast %35 : vector<1x128x128xbf16> to vector<2x128x128xbf16>
    %37 = arith.mulf %34, %36 : vector<2x128x128xbf16>
    %38 = tpu.concatenate %33, %33, %33, %33, %33, %33, %33, %33, %33, %33, %33, %33, %33, %33, %33, %33 in 1 : vector<2x8x128xbf16>, vector<2x8x128xbf16>, vector<2x8x128xbf16>, vector<2x8x128xbf16>, vector<2x8x128xbf16>, vector<2x8x128xbf16>, vector<2x8x128xbf16>, vector<2x8x128xbf16>, vector<2x8x128xbf16>, vector<2x8x128xbf16>, vector<2x8x128xbf16>, vector<2x8x128xbf16>, vector<2x8x128xbf16>, vector<2x8x128xbf16>, vector<2x8x128xbf16>, vector<2x8x128xbf16> -> vector<2x128x128xbf16>
    %39 = vector.shape_cast %7 : vector<128x128xbf16> to vector<1x128x128xbf16>
    %40 = vector.broadcast %39 : vector<1x128x128xbf16> to vector<2x128x128xbf16>
    %41 = arith.mulf %38, %40 : vector<2x128x128xbf16>
    "tpu.trace_start"() <{level = 10 : i32, message = "bqd,bmd->bqm"}> : () -> ()
    %cst_26 = arith.constant dense<0.000000e+00> : vector<2x8x128xf32>
    %42 = tpu.matmul %29, %37, %cst_26 {dimension_numbers = #tpu.dot_dimension_numbers<[2], [2], [1], [1], [0, 0, 0, 1, 1, 1], [0], [0]>} : vector<2x8x128xbf16>, vector<2x128x128xbf16>, vector<2x8x128xf32> -> vector<2x8x128xf32>
    "tpu.trace_stop"() : () -> ()
    %cst_27 = arith.constant dense<0xFF800000> : vector<2x8xf32>
    %43 = vector.multi_reduction <maximumf>, %42, %cst_27 [2] : vector<2x8x128xf32> to vector<2x8xf32>
    %44 = vector.shape_cast %43 : vector<2x8xf32> to vector<2x8x1xf32>
    %45 = vector.broadcast %44 : vector<2x8x1xf32> to vector<2x8x128xf32>
    %46 = arith.subf %42, %45 : vector<2x8x128xf32>
    %47 = math.exp %46 : vector<2x8x128xf32>
    %48 = arith.truncf %47 : vector<2x8x128xf32> to vector<2x8x128xbf16>
    "tpu.trace_start"() <{level = 10 : i32, message = "bqm,mn->bqn"}> : () -> ()
    %cst_28 = arith.constant dense<0.000000e+00> : vector<2x8x128xf32>
    %49 = tpu.matmul %48, %8, %cst_28 {dimension_numbers = #tpu.dot_dimension_numbers<[2], [0], [0, 1], [1], [0, 0, 0, 1, 1, 1], [], []>} : vector<2x8x128xbf16>, vector<128x128xbf16>, vector<2x8x128xf32> -> vector<2x8x128xf32>
    "tpu.trace_stop"() : () -> ()
    %cst_29 = arith.constant 1.000000e-30 : f32
    %50 = vector.broadcast %cst_29 : f32 to vector<2x8x128xf32>
    %51 = arith.maximumf %49, %50 : vector<2x8x128xf32>
    %52 = tpu.reciprocal %51 {approx = true} : vector<2x8x128xf32> -> vector<2x8x128xf32>
    %53 = arith.mulf %47, %52 : vector<2x8x128xf32>
    %54 = arith.truncf %53 : vector<2x8x128xf32> to vector<2x8x128xbf16>
    "tpu.trace_start"() <{level = 10 : i32, message = "bqm,bmd->bqd"}> : () -> ()
    %cst_30 = arith.constant dense<0.000000e+00> : vector<2x8x128xf32>
    %55 = tpu.matmul %54, %41, %cst_30 {dimension_numbers = #tpu.dot_dimension_numbers<[2], [1], [1], [2], [0, 0, 0, 1, 1, 2], [0], [0]>} : vector<2x8x128xbf16>, vector<2x128x128xbf16>, vector<2x8x128xf32> -> vector<2x8x128xf32>
    "tpu.trace_stop"() : () -> ()
    %56 = vector.shape_cast %55 : vector<2x8x128xf32> to vector<16x128xf32>
    %57 = arith.truncf %56 : vector<16x128xf32> to vector<16x128xbf16>
    %cst_31 = arith.constant dense<0.000000e+00> : vector<16x128xf32>
    %58 = tpu.matmul %57, %23, %cst_31 {dimension_numbers = #tpu.dot_dimension_numbers<[1], [0], [0], [1], [0, 0, 1, 1], [], []>} : vector<16x128xbf16>, vector<128x128xbf16>, vector<16x128xf32> -> vector<16x128xf32>
    %59 = vector.broadcast %25 : vector<1x128xf32> to vector<16x128xf32>
    %60 = arith.addf %58, %59 : vector<16x128xf32>
    %61 = arith.addf %4, %60 : vector<16x128xf32>
    %c0_32 = arith.constant 0 : index
    %c0_33 = arith.constant 0 : index
    %c512 = arith.constant 512 : index
    %62 = vector.load %arg8[%c0_32, %c0_33, %c512] : memref<1x1x1920xf32, #tpu.memory_space<vmem>>, vector<1x1x128xf32>
    %63 = vector.shape_cast %62 : vector<1x1x128xf32> to vector<1x128xf32>
    %c0_34 = arith.constant 0 : index
    %c0_35 = arith.constant 0 : index
    %c640 = arith.constant 640 : index
    %64 = vector.load %arg8[%c0_34, %c0_35, %c640] : memref<1x1x1920xf32, #tpu.memory_space<vmem>>, vector<1x1x128xf32>
    %65 = vector.shape_cast %64 : vector<1x1x128xf32> to vector<1x128xf32>
    %cst_36 = arith.constant dense<0.000000e+00> : vector<16xf32>
    %66 = vector.multi_reduction <add>, %61, %cst_36 [1] : vector<16x128xf32> to vector<16xf32>
    %67 = vector.shape_cast %66 : vector<16xf32> to vector<16x1xf32>
    %cst_37 = arith.constant 1.280000e+02 : f32
    %68 = vector.broadcast %cst_37 : f32 to vector<16x1xf32>
    %69 = arith.divf %67, %68 : vector<16x1xf32>
    %70 = vector.broadcast %69 : vector<16x1xf32> to vector<16x128xf32>
    %71 = arith.subf %61, %70 : vector<16x128xf32>
    %72 = arith.mulf %71, %71 : vector<16x128xf32>
    %cst_38 = arith.constant dense<0.000000e+00> : vector<16xf32>
    %73 = vector.multi_reduction <add>, %72, %cst_38 [1] : vector<16x128xf32> to vector<16xf32>
    %74 = vector.shape_cast %73 : vector<16xf32> to vector<16x1xf32>
    %cst_39 = arith.constant 1.280000e+02 : f32
    %75 = vector.broadcast %cst_39 : f32 to vector<16x1xf32>
    %76 = arith.divf %74, %75 : vector<16x1xf32>
    %77 = vector.broadcast %69 : vector<16x1xf32> to vector<16x128xf32>
    %78 = arith.subf %61, %77 : vector<16x128xf32>
    %cst_40 = arith.constant 9.99999997E-7 : f32
    %79 = vector.broadcast %cst_40 : f32 to vector<16x1xf32>
    %80 = arith.addf %76, %79 : vector<16x1xf32>
    %81 = math.rsqrt %80 : vector<16x1xf32>
    %82 = vector.broadcast %81 : vector<16x1xf32> to vector<16x128xf32>
    %83 = arith.mulf %78, %82 : vector<16x128xf32>
    %84 = vector.broadcast %63 : vector<1x128xf32> to vector<16x128xf32>
    %85 = arith.mulf %83, %84 : vector<16x128xf32>
    %86 = vector.broadcast %65 : vector<1x128xf32> to vector<16x128xf32>
    %87 = arith.addf %85, %86 : vector<16x128xf32>
    %c0_41 = arith.constant 0 : index
    %c0_42 = arith.constant 0 : index
    %c512_43 = arith.constant 512 : index
    %88 = vector.load %arg6[%c0_41, %c0_42, %c512_43] : memref<1x128x1024xbf16, #tpu.memory_space<vmem>>, vector<1x128x128xbf16>
    %89 = vector.shape_cast %88 : vector<1x128x128xbf16> to vector<128x128xbf16>
    %90 = arith.truncf %87 : vector<16x128xf32> to vector<16x128xbf16>
    %cst_44 = arith.constant dense<0.000000e+00> : vector<16x128xf32>
    %91 = tpu.matmul %90, %89, %cst_44 {dimension_numbers = #tpu.dot_dimension_numbers<[1], [0], [0], [1], [0, 0, 1, 1], [], []>} : vector<16x128xbf16>, vector<128x128xbf16>, vector<16x128xf32> -> vector<16x128xf32>
    %c0_45 = arith.constant 0 : index
    %c0_46 = arith.constant 0 : index
    %c768 = arith.constant 768 : index
    %92 = vector.load %arg8[%c0_45, %c0_46, %c768] : memref<1x1x1920xf32, #tpu.memory_space<vmem>>, vector<1x1x128xf32>
    %93 = vector.shape_cast %92 : vector<1x1x128xf32> to vector<1x128xf32>
    %94 = vector.broadcast %93 : vector<1x128xf32> to vector<16x128xf32>
    %95 = arith.addf %91, %94 : vector<16x128xf32>
    %96 = vector.extract_strided_slice %6 {offsets = [0, 0], sizes = [32, 128], strides = [1, 1]} : vector<32x256xbf16> to vector<32x128xbf16>
    %97 = vector.extract_strided_slice %6 {offsets = [0, 128], sizes = [32, 128], strides = [1, 1]} : vector<32x256xbf16> to vector<32x128xbf16>
    %c0_47 = arith.constant 0 : index
    %c0_48 = arith.constant 0 : index
    %c640_49 = arith.constant 640 : index
    %98 = vector.load %arg6[%c0_47, %c0_48, %c640_49] : memref<1x128x1024xbf16, #tpu.memory_space<vmem>>, vector<1x128x128xbf16>
    %99 = vector.shape_cast %98 : vector<1x128x128xbf16> to vector<128x128xbf16>
    %c0_50 = arith.constant 0 : index
    %c0_51 = arith.constant 0 : index
    %c896 = arith.constant 896 : index
    %100 = vector.load %arg8[%c0_50, %c0_51, %c896] : memref<1x1x1920xf32, #tpu.memory_space<vmem>>, vector<1x1x128xf32>
    %101 = vector.shape_cast %100 : vector<1x1x128xf32> to vector<1x128xf32>
    %cst_52 = arith.constant 2.500000e-01 : f32
    %102 = vector.broadcast %cst_52 : f32 to vector<16x128xf32>
    %103 = arith.mulf %95, %102 : vector<16x128xf32>
    %104 = vector.shape_cast %103 : vector<16x128xf32> to vector<2x8x128xf32>
    %105 = arith.truncf %104 : vector<2x8x128xf32> to vector<2x8x128xbf16>
    %106 = vector.shape_cast %96 : vector<32x128xbf16> to vector<2x16x128xbf16>
    %107 = vector.shape_cast %97 : vector<32x128xbf16> to vector<2x16x128xbf16>
    %108 = tpu.concatenate %106, %106, %106, %106, %106, %106, %106, %106 in 1 : vector<2x16x128xbf16>, vector<2x16x128xbf16>, vector<2x16x128xbf16>, vector<2x16x128xbf16>, vector<2x16x128xbf16>, vector<2x16x128xbf16>, vector<2x16x128xbf16>, vector<2x16x128xbf16> -> vector<2x128x128xbf16>
    %109 = vector.shape_cast %9 : vector<128x128xbf16> to vector<1x128x128xbf16>
    %110 = vector.broadcast %109 : vector<1x128x128xbf16> to vector<2x128x128xbf16>
    %111 = arith.mulf %108, %110 : vector<2x128x128xbf16>
    %112 = tpu.concatenate %107, %107, %107, %107, %107, %107, %107, %107 in 1 : vector<2x16x128xbf16>, vector<2x16x128xbf16>, vector<2x16x128xbf16>, vector<2x16x128xbf16>, vector<2x16x128xbf16>, vector<2x16x128xbf16>, vector<2x16x128xbf16>, vector<2x16x128xbf16> -> vector<2x128x128xbf16>
    %113 = vector.shape_cast %9 : vector<128x128xbf16> to vector<1x128x128xbf16>
    %114 = vector.broadcast %113 : vector<1x128x128xbf16> to vector<2x128x128xbf16>
    %115 = arith.mulf %112, %114 : vector<2x128x128xbf16>
    "tpu.trace_start"() <{level = 10 : i32, message = "bqd,bmd->bqm"}> : () -> ()
    %cst_53 = arith.constant dense<0.000000e+00> : vector<2x8x128xf32>
    %116 = tpu.matmul %105, %111, %cst_53 {dimension_numbers = #tpu.dot_dimension_numbers<[2], [2], [1], [1], [0, 0, 0, 1, 1, 1], [0], [0]>} : vector<2x8x128xbf16>, vector<2x128x128xbf16>, vector<2x8x128xf32> -> vector<2x8x128xf32>
    "tpu.trace_stop"() : () -> ()
    %cst_54 = arith.constant dense<0xFF800000> : vector<2x8xf32>
    %117 = vector.multi_reduction <maximumf>, %116, %cst_54 [2] : vector<2x8x128xf32> to vector<2x8xf32>
    %118 = vector.shape_cast %117 : vector<2x8xf32> to vector<2x8x1xf32>
    %119 = vector.broadcast %118 : vector<2x8x1xf32> to vector<2x8x128xf32>
    %120 = arith.subf %116, %119 : vector<2x8x128xf32>
    %121 = math.exp %120 : vector<2x8x128xf32>
    %122 = arith.truncf %121 : vector<2x8x128xf32> to vector<2x8x128xbf16>
    "tpu.trace_start"() <{level = 10 : i32, message = "bqm,mn->bqn"}> : () -> ()
    %cst_55 = arith.constant dense<0.000000e+00> : vector<2x8x128xf32>
    %123 = tpu.matmul %122, %10, %cst_55 {dimension_numbers = #tpu.dot_dimension_numbers<[2], [0], [0, 1], [1], [0, 0, 0, 1, 1, 1], [], []>} : vector<2x8x128xbf16>, vector<128x128xbf16>, vector<2x8x128xf32> -> vector<2x8x128xf32>
    "tpu.trace_stop"() : () -> ()
    %cst_56 = arith.constant 1.000000e-30 : f32
    %124 = vector.broadcast %cst_56 : f32 to vector<2x8x128xf32>
    %125 = arith.maximumf %123, %124 : vector<2x8x128xf32>
    %126 = tpu.reciprocal %125 {approx = true} : vector<2x8x128xf32> -> vector<2x8x128xf32>
    %127 = arith.mulf %121, %126 : vector<2x8x128xf32>
    %128 = arith.truncf %127 : vector<2x8x128xf32> to vector<2x8x128xbf16>
    "tpu.trace_start"() <{level = 10 : i32, message = "bqm,bmd->bqd"}> : () -> ()
    %cst_57 = arith.constant dense<0.000000e+00> : vector<2x8x128xf32>
    %129 = tpu.matmul %128, %115, %cst_57 {dimension_numbers = #tpu.dot_dimension_numbers<[2], [1], [1], [2], [0, 0, 0, 1, 1, 2], [0], [0]>} : vector<2x8x128xbf16>, vector<2x128x128xbf16>, vector<2x8x128xf32> -> vector<2x8x128xf32>
    "tpu.trace_stop"() : () -> ()
    %130 = vector.shape_cast %129 : vector<2x8x128xf32> to vector<16x128xf32>
    %131 = arith.truncf %130 : vector<16x128xf32> to vector<16x128xbf16>
    %cst_58 = arith.constant dense<0.000000e+00> : vector<16x128xf32>
    %132 = tpu.matmul %131, %99, %cst_58 {dimension_numbers = #tpu.dot_dimension_numbers<[1], [0], [0], [1], [0, 0, 1, 1], [], []>} : vector<16x128xbf16>, vector<128x128xbf16>, vector<16x128xf32> -> vector<16x128xf32>
    %133 = vector.broadcast %101 : vector<1x128xf32> to vector<16x128xf32>
    %134 = arith.addf %132, %133 : vector<16x128xf32>
    %135 = arith.addf %87, %134 : vector<16x128xf32>
    %c0_59 = arith.constant 0 : index
    %c0_60 = arith.constant 0 : index
    %c1024 = arith.constant 1024 : index
    %136 = vector.load %arg8[%c0_59, %c0_60, %c1024] : memref<1x1x1920xf32, #tpu.memory_space<vmem>>, vector<1x1x128xf32>
    %137 = vector.shape_cast %136 : vector<1x1x128xf32> to vector<1x128xf32>
    %c0_61 = arith.constant 0 : index
    %c0_62 = arith.constant 0 : index
    %c1152 = arith.constant 1152 : index
    %138 = vector.load %arg8[%c0_61, %c0_62, %c1152] : memref<1x1x1920xf32, #tpu.memory_space<vmem>>, vector<1x1x128xf32>
    %139 = vector.shape_cast %138 : vector<1x1x128xf32> to vector<1x128xf32>
    %cst_63 = arith.constant dense<0.000000e+00> : vector<16xf32>
    %140 = vector.multi_reduction <add>, %135, %cst_63 [1] : vector<16x128xf32> to vector<16xf32>
    %141 = vector.shape_cast %140 : vector<16xf32> to vector<16x1xf32>
    %cst_64 = arith.constant 1.280000e+02 : f32
    %142 = vector.broadcast %cst_64 : f32 to vector<16x1xf32>
    %143 = arith.divf %141, %142 : vector<16x1xf32>
    %144 = vector.broadcast %143 : vector<16x1xf32> to vector<16x128xf32>
    %145 = arith.subf %135, %144 : vector<16x128xf32>
    %146 = arith.mulf %145, %145 : vector<16x128xf32>
    %cst_65 = arith.constant dense<0.000000e+00> : vector<16xf32>
    %147 = vector.multi_reduction <add>, %146, %cst_65 [1] : vector<16x128xf32> to vector<16xf32>
    %148 = vector.shape_cast %147 : vector<16xf32> to vector<16x1xf32>
    %cst_66 = arith.constant 1.280000e+02 : f32
    %149 = vector.broadcast %cst_66 : f32 to vector<16x1xf32>
    %150 = arith.divf %148, %149 : vector<16x1xf32>
    %151 = vector.broadcast %143 : vector<16x1xf32> to vector<16x128xf32>
    %152 = arith.subf %135, %151 : vector<16x128xf32>
    %cst_67 = arith.constant 9.99999997E-7 : f32
    %153 = vector.broadcast %cst_67 : f32 to vector<16x1xf32>
    %154 = arith.addf %150, %153 : vector<16x1xf32>
    %155 = math.rsqrt %154 : vector<16x1xf32>
    %156 = vector.broadcast %155 : vector<16x1xf32> to vector<16x128xf32>
    %157 = arith.mulf %152, %156 : vector<16x128xf32>
    %158 = vector.broadcast %137 : vector<1x128xf32> to vector<16x128xf32>
    %159 = arith.mulf %157, %158 : vector<16x128xf32>
    %160 = vector.broadcast %139 : vector<1x128xf32> to vector<16x128xf32>
    %161 = arith.addf %159, %160 : vector<16x128xf32>
    %c0_68 = arith.constant 0 : index
    %c0_69 = arith.constant 0 : index
    %c768_70 = arith.constant 768 : index
    %162 = vector.load %arg6[%c0_68, %c0_69, %c768_70] : memref<1x128x1024xbf16, #tpu.memory_space<vmem>>, vector<1x128x256xbf16>
    %163 = vector.shape_cast %162 : vector<1x128x256xbf16> to vector<128x256xbf16>
    %164 = arith.truncf %161 : vector<16x128xf32> to vector<16x128xbf16>
    %cst_71 = arith.constant dense<0.000000e+00> : vector<16x256xf32>
    %165 = tpu.matmul %164, %163, %cst_71 {dimension_numbers = #tpu.dot_dimension_numbers<[1], [0], [0], [1], [0, 0, 1, 1], [], []>} : vector<16x128xbf16>, vector<128x256xbf16>, vector<16x256xf32> -> vector<16x256xf32>
    %c0_72 = arith.constant 0 : index
    %c0_73 = arith.constant 0 : index
    %c1280 = arith.constant 1280 : index
    %166 = vector.load %arg8[%c0_72, %c0_73, %c1280] : memref<1x1x1920xf32, #tpu.memory_space<vmem>>, vector<1x1x256xf32>
    %167 = vector.shape_cast %166 : vector<1x1x256xf32> to vector<1x256xf32>
    %168 = vector.broadcast %167 : vector<1x256xf32> to vector<16x256xf32>
    %169 = arith.addf %165, %168 : vector<16x256xf32>
    %cst_74 = arith.constant 0.000000e+00 : f32
    %170 = vector.broadcast %cst_74 : f32 to vector<16x256xf32>
    %171 = arith.maximumf %169, %170 : vector<16x256xf32>
    %c0_75 = arith.constant 0 : index
    %c0_76 = arith.constant 0 : index
    %c0_77 = arith.constant 0 : index
    %172 = vector.load %arg7[%c0_75, %c0_76, %c0_77] : memref<1x256x128xbf16, #tpu.memory_space<vmem>>, vector<1x256x128xbf16>
    %173 = vector.shape_cast %172 : vector<1x256x128xbf16> to vector<256x128xbf16>
    %174 = arith.truncf %171 : vector<16x256xf32> to vector<16x256xbf16>
    %cst_78 = arith.constant dense<0.000000e+00> : vector<16x128xf32>
    %175 = tpu.matmul %174, %173, %cst_78 {dimension_numbers = #tpu.dot_dimension_numbers<[1], [0], [0], [1], [0, 0, 1, 1], [], []>} : vector<16x256xbf16>, vector<256x128xbf16>, vector<16x128xf32> -> vector<16x128xf32>
    %c0_79 = arith.constant 0 : index
    %c0_80 = arith.constant 0 : index
    %c1536 = arith.constant 1536 : index
    %176 = vector.load %arg8[%c0_79, %c0_80, %c1536] : memref<1x1x1920xf32, #tpu.memory_space<vmem>>, vector<1x1x128xf32>
    %177 = vector.shape_cast %176 : vector<1x1x128xf32> to vector<1x128xf32>
    %178 = vector.broadcast %177 : vector<1x128xf32> to vector<16x128xf32>
    %179 = arith.addf %175, %178 : vector<16x128xf32>
    %180 = arith.addf %161, %179 : vector<16x128xf32>
    %c0_81 = arith.constant 0 : index
    %c0_82 = arith.constant 0 : index
    %c1664 = arith.constant 1664 : index
    %181 = vector.load %arg8[%c0_81, %c0_82, %c1664] : memref<1x1x1920xf32, #tpu.memory_space<vmem>>, vector<1x1x128xf32>
    %182 = vector.shape_cast %181 : vector<1x1x128xf32> to vector<1x128xf32>
    %c0_83 = arith.constant 0 : index
    %c0_84 = arith.constant 0 : index
    %c1792 = arith.constant 1792 : index
    %183 = vector.load %arg8[%c0_83, %c0_84, %c1792] : memref<1x1x1920xf32, #tpu.memory_space<vmem>>, vector<1x1x128xf32>
    %184 = vector.shape_cast %183 : vector<1x1x128xf32> to vector<1x128xf32>
    %cst_85 = arith.constant dense<0.000000e+00> : vector<16xf32>
    %185 = vector.multi_reduction <add>, %180, %cst_85 [1] : vector<16x128xf32> to vector<16xf32>
    %186 = vector.shape_cast %185 : vector<16xf32> to vector<16x1xf32>
    %cst_86 = arith.constant 1.280000e+02 : f32
    %187 = vector.broadcast %cst_86 : f32 to vector<16x1xf32>
    %188 = arith.divf %186, %187 : vector<16x1xf32>
    %189 = vector.broadcast %188 : vector<16x1xf32> to vector<16x128xf32>
    %190 = arith.subf %180, %189 : vector<16x128xf32>
    %191 = arith.mulf %190, %190 : vector<16x128xf32>
    %cst_87 = arith.constant dense<0.000000e+00> : vector<16xf32>
    %192 = vector.multi_reduction <add>, %191, %cst_87 [1] : vector<16x128xf32> to vector<16xf32>
    %193 = vector.shape_cast %192 : vector<16xf32> to vector<16x1xf32>
    %cst_88 = arith.constant 1.280000e+02 : f32
    %194 = vector.broadcast %cst_88 : f32 to vector<16x1xf32>
    %195 = arith.divf %193, %194 : vector<16x1xf32>
    %196 = vector.broadcast %188 : vector<16x1xf32> to vector<16x128xf32>
    %197 = arith.subf %180, %196 : vector<16x128xf32>
    %cst_89 = arith.constant 9.99999997E-7 : f32
    %198 = vector.broadcast %cst_89 : f32 to vector<16x1xf32>
    %199 = arith.addf %195, %198 : vector<16x1xf32>
    %200 = math.rsqrt %199 : vector<16x1xf32>
    %201 = vector.broadcast %200 : vector<16x1xf32> to vector<16x128xf32>
    %202 = arith.mulf %197, %201 : vector<16x128xf32>
    %203 = vector.broadcast %182 : vector<1x128xf32> to vector<16x128xf32>
    %204 = arith.mulf %202, %203 : vector<16x128xf32>
    %205 = vector.broadcast %184 : vector<1x128xf32> to vector<16x128xf32>
    %206 = arith.addf %204, %205 : vector<16x128xf32>
    %207 = vector.shape_cast %206 : vector<16x128xf32> to vector<2x8x128xf32>
    %c0_90 = arith.constant 0 : index
    %c0_91 = arith.constant 0 : index
    %c0_92 = arith.constant 0 : index
    %208 = vector.load %arg10[%c0_90, %c0_91, %c0_92] : memref<2x8x128xf32, #tpu.memory_space<vmem>>, vector<2x8x128xf32>
    tpu.vector_store %arg10[%c0_90, %c0_91, %c0_92], %207 {strides = array<i32>} : memref<2x8x128xf32, #tpu.memory_space<vmem>>, vector<2x8x128xf32>,
    return
  }
  func.func @transform_0(%arg0: i32) -> (i32, i32, i32) {
    %c0_i32 = arith.constant 0 : i32
    %c0_i32_0 = arith.constant 0 : i32
    %c0_i32_1 = arith.constant 0 : i32
    %c0_i32_2 = arith.constant 0 : i32
    return %c0_i32, %c0_i32_0, %c0_i32_1 : i32, i32, i32
  }
  func.func @transform_1(%arg0: i32) -> (i32, i32) {
    %c0_i32 = arith.constant 0 : i32
    %c0_i32_0 = arith.constant 0 : i32
    %c0_i32_1 = arith.constant 0 : i32
    return %c0_i32, %c0_i32_0 : i32, i32
  }
  func.func @transform_2(%arg0: i32) -> (i32, i32) {
    %c0_i32 = arith.constant 0 : i32
    %c0_i32_0 = arith.constant 0 : i32
    %c0_i32_1 = arith.constant 0 : i32
    return %c0_i32, %c0_i32_0 : i32, i32
  }
  func.func @transform_3(%arg0: i32) -> (i32, i32) {
    %c0_i32 = arith.constant 0 : i32
    %c0_i32_0 = arith.constant 0 : i32
    %c0_i32_1 = arith.constant 0 : i32
    return %c0_i32, %c0_i32_0 : i32, i32
  }
  func.func @transform_4(%arg0: i32) -> (i32, i32) {
    %c0_i32 = arith.constant 0 : i32
    %c0_i32_0 = arith.constant 0 : i32
    %c0_i32_1 = arith.constant 0 : i32
    return %c0_i32, %c0_i32_0 : i32, i32
  }
  func.func @transform_5(%arg0: i32) -> (i32, i32, i32) {
    %c0_i32 = arith.constant 0 : i32
    %c0_i32_0 = arith.constant 0 : i32
    %c0_i32_1 = arith.constant 0 : i32
    return %arg0, %c0_i32, %c0_i32_0 : i32, i32, i32
  }
  func.func @transform_6(%arg0: i32) -> (i32, i32, i32) {
    %c0_i32 = arith.constant 0 : i32
    %c0_i32_0 = arith.constant 0 : i32
    %c0_i32_1 = arith.constant 0 : i32
    return %arg0, %c0_i32, %c0_i32_0 : i32, i32, i32
  }
  func.func @transform_7(%arg0: i32) -> (i32, i32, i32) {
    %c0_i32 = arith.constant 0 : i32
    %c0_i32_0 = arith.constant 0 : i32
    %c0_i32_1 = arith.constant 0 : i32
    return %arg0, %c0_i32, %c0_i32_0 : i32, i32, i32
  }
  func.func @transform_8(%arg0: i32) -> (i32, i32, i32) {
    %c0_i32 = arith.constant 0 : i32
    %c0_i32_0 = arith.constant 0 : i32
    %c0_i32_1 = arith.constant 0 : i32
    return %arg0, %c0_i32, %c0_i32_0 : i32, i32, i32
  }
  func.func @transform_9(%arg0: i32) -> (i32, i32, i32) {
    %c0_i32 = arith.constant 0 : i32
    %c0_i32_0 = arith.constant 0 : i32
    %c0_i32_1 = arith.constant 0 : i32
    %c0_i32_2 = arith.constant 0 : i32
    return %c0_i32, %c0_i32_0, %c0_i32_1 : i32, i32, i32
  }
}

</mosaic_0001>

<llo_original>
// kernel: tpu_custom_call.1
$region0: #{tpu_custom_call.1}
  #allocation0 [shape = 'u32[]', space=smem, size = 0x4, offset = 0x4, fixed_abs, tag = 'smem constant byte address 0x4 - core index']
  #allocation1 [shape = 'u32[144,128]{1,0:T(1,128)}', space=vmem, size = 0x12000, scoped, tag = 'internal scratch']
  %s0 = inlined_call_operand.hbm [shape: f32[2,8,128], index: 0, kind: input, shape index: {}]
  %s1 = inlined_call_operand.hbm [shape: bf16[128,128], index: 1, kind: input, shape index: {}]
  %s2 = inlined_call_operand.hbm [shape: bf16[128,128], index: 2, kind: input, shape index: {}]
  %s3 = inlined_call_operand.hbm [shape: bf16[128,128], index: 3, kind: input, shape index: {}]
  %s4 = inlined_call_operand.hbm [shape: bf16[128,128], index: 4, kind: input, shape index: {}]
  %s5 = inlined_call_operand.hbm [shape: bf16[2,128,1024], index: 5, kind: input, shape index: {}]
  %s6 = inlined_call_operand.hbm [shape: bf16[2,256,128], index: 6, kind: input, shape index: {}]
  %s7 = inlined_call_operand.hbm [shape: f32[2,1,1920], index: 7, kind: input, shape index: {}]
  %s8 = inlined_call_operand.hbm [shape: bf16[2,32,256], index: 8, kind: input, shape index: {}]
  %s9 = inlined_call_operand.hbm [shape: f32[2,8,128], index: 9, kind: output, shape index: {}]
  %s10 = sld [smem:[#allocation0]]
  $region109: #{tpu_custom_call.1} parent=0
    _
  %s12 = ssub.s32 1, %s10
  %s13 = scalar_select 0, %s12, %s10
  $region1: #{tpu_custom_call.1} parent=0
    #allocation2 [shape = 'u8[8192]{0}', space=vmem, size = 0x2000, scoped, tag = 'input window, operand 0, single buffered']
    #allocation3 [shape = 's32[2]{0}', space=sflag, size = 0x8, scoped, tag = 'scoped memory for tpu_custom_call.1']
    #allocation4 [shape = 's32[2]{0}', space=sflag, size = 0x8, scoped, tag = 'scoped memory for tpu_custom_call.1']
    #allocation5 [shape = 'u8[32768]{0}', space=vmem, size = 0x8000, scoped, tag = 'input window, operand 1, single buffered']
    #allocation6 [shape = 's32[1]{0}', space=sflag, size = 0x4, scoped, tag = 'scoped memory for tpu_custom_call.1']
    #allocation7 [shape = 'u8[32768]{0}', space=vmem, size = 0x8000, scoped, tag = 'input window, operand 2, single buffered']
    #allocation8 [shape = 'u8[32768]{0}', space=vmem, size = 0x8000, scoped, tag = 'input window, operand 3, single buffered']
    #allocation9 [shape = 's32[1]{0}', space=sflag, size = 0x4, scoped, tag = 'scoped memory for tpu_custom_call.1']
    #allocation10 [shape = 'u8[32768]{0}', space=vmem, size = 0x8000, scoped, tag = 'input window, operand 4, single buffered']
    #allocation11 [shape = 'u8[524288]{0}', space=vmem, size = 0x80000, scoped, tag = 'input window, operand 5']
    #allocation12 [shape = 's32[2]{0}', space=sflag, size = 0x8, scoped, tag = 'scoped memory for tpu_custom_call.1']
    #allocation13 [shape = 'u8[131072]{0}', space=vmem, size = 0x20000, scoped, tag = 'input window, operand 6']
    #allocation14 [shape = 'u8[15360]{0}', space=vmem, size = 0x3c00, scoped, tag = 'input window, operand 7']
    #allocation15 [shape = 's32[2]{0}', space=sflag, size = 0x8, scoped, tag = 'scoped memory for tpu_custom_call.1']
    #allocation16 [shape = 'u8[32768]{0}', space=vmem, size = 0x8000, scoped, tag = 'input window, operand 8']
    #allocation17 [shape = 'u8[8192]{0}', space=vmem, size = 0x2000, scoped, tag = 'output window, operand 0, single buffered']
    %14 = vsyncpa [#allocation3], 0
    %15 = vsyncpa [#allocation6], 0
    %16 = vsyncpa [#allocation9], 0
    %17 = vsyncpa [#allocation12], 0
    %s18 = scalar_lea.sflag [#allocation12], 1
    %19 = vsyncpa %s18, 0
    %20 = vsyncpa [#allocation15], 0
    %s21 = scalar_lea.sflag [#allocation15], 1
    %22 = vsyncpa %s21, 0
    %23 = vsyncpa [#allocation4], 0
    loop: start=0, step=1, limit=4
    $region2: #{tpu_custom_call.1} parent=1 // loop_pre_header
      _
    $region3: #{tpu_custom_call.1} parent=1 // loop_header
      %s25 = sphi 0, %s29
      %p26 = scmp.ge.s32.totalorder %s25, 4
      %s33 = sphi 0, %s33
      %s35 = sphi 0, %s33
      %s36 = sphi 0, %s35
      %s50 = sphi 0, %s36
      %s54 = sphi 0, %s54
      %s56 = sphi 0, %s54
      %s57 = sphi 0, %s56
      %s71 = sphi 0, %s57
      %s75 = sphi 0, %s75
      %s77 = sphi 0, %s75
      %s78 = sphi 0, %s77
      %s92 = sphi 0, %s78
      %s96 = sphi 0, %s96
      %s98 = sphi 0, %s96
      %s99 = sphi 0, %s98
      %s113 = sphi 0, %s99
      %s117 = sphi 0, %s117
      %s119 = sphi 0, %s117
      %s120 = sphi 0, %s119
      %s134 = sphi 0, %s120
      %s140 = sphi 0, %s142
      %s143 = sphi 0, %s140
      %s144 = sphi 0, %s143
      %s160 = sphi 0, %s144
      %s166 = sphi 0, %s168
      %s169 = sphi 0, %s166
      %s170 = sphi 0, %s169
      %s186 = sphi 0, %s170
      %s192 = sphi 0, %s194
      %s195 = sphi 0, %s192
      %s196 = sphi 0, %s195
      %s212 = sphi 0, %s196
      %s218 = sphi 0, %s220
      %s221 = sphi 0, %s218
      %s222 = sphi 0, %s221
      %s238 = sphi 0, %s222
      %s242 = sphi 0, %s242
      %s244 = sphi 0, %s242
      %s245 = sphi 0, %s244
      %s259 = sphi 0, %s245
    $region4: #{tpu_custom_call.1} parent=1 // loop_header_branch
      %28 = sbr.rel (%p26) target = $region8
    $region5: #{tpu_custom_call.1} parent=1 // loop_body
      %s30 = ssub.s32 %s25, 1
      %s31 = ssub.s32 %s25, 2
      %s32 = sadd.s32 %s25, 1
      %s34 = sadd.s32 %s33, 1
      %p37 = scmp.eq.s32.totalorder %s25, 1
      %p38 = scmp.ne.s32.totalorder %s33, %s35
      %p39 = scmp.eq.s32.totalorder %s25, 0
      %p40 = por %p38, %p39
      %p41 = scmp.ne.s32.totalorder %s33, %s35
      %p42 = scmp.eq.s32.totalorder %s30, 1
      %p43 = por %p41, %p42
      %p44 = scmp.ne.s32.totalorder %s35, %s36
      %p45 = scmp.eq.s32.totalorder %s30, 0
      %p46 = por %p44, %p45
      %p47 = scmp.ne.s32.totalorder %s35, %s36
      %p48 = scmp.eq.s32.totalorder %s31, 1
      %p49 = por %p47, %p48
      %p51 = scmp.ne.s32.totalorder %s36, %s50
      %p52 = scmp.eq.s32.totalorder %s31, 0
      %p53 = por %p51, %p52
      %s55 = sadd.s32 %s54, 1
      %p58 = scmp.eq.s32.totalorder %s25, 1
      %p59 = scmp.ne.s32.totalorder %s54, %s56
      %p60 = scmp.eq.s32.totalorder %s25, 0
      %p61 = por %p59, %p60
      %p62 = scmp.ne.s32.totalorder %s54, %s56
      %p63 = scmp.eq.s32.totalorder %s30, 1
      %p64 = por %p62, %p63
      %p65 = scmp.ne.s32.totalorder %s56, %s57
      %p66 = scmp.eq.s32.totalorder %s30, 0
      %p67 = por %p65, %p66
      %p68 = scmp.ne.s32.totalorder %s56, %s57
      %p69 = scmp.eq.s32.totalorder %s31, 1
      %p70 = por %p68, %p69
      %p72 = scmp.ne.s32.totalorder %s57, %s71
      %p73 = scmp.eq.s32.totalorder %s31, 0
      %p74 = por %p72, %p73
      %s76 = sadd.s32 %s75, 1
      %p79 = scmp.eq.s32.totalorder %s25, 1
      %p80 = scmp.ne.s32.totalorder %s75, %s77
      %p81 = scmp.eq.s32.totalorder %s25, 0
      %p82 = por %p80, %p81
      %p83 = scmp.ne.s32.totalorder %s75, %s77
      %p84 = scmp.eq.s32.totalorder %s30, 1
      %p85 = por %p83, %p84
      %p86 = scmp.ne.s32.totalorder %s77, %s78
      %p87 = scmp.eq.s32.totalorder %s30, 0
      %p88 = por %p86, %p87
      %p89 = scmp.ne.s32.totalorder %s77, %s78
      %p90 = scmp.eq.s32.totalorder %s31, 1
      %p91 = por %p89, %p90
      %p93 = scmp.ne.s32.totalorder %s78, %s92
      %p94 = scmp.eq.s32.totalorder %s31, 0
      %p95 = por %p93, %p94
      %s97 = sadd.s32 %s96, 1
      %p100 = scmp.eq.s32.totalorder %s25, 1
      %p101 = scmp.ne.s32.totalorder %s96, %s98
      %p102 = scmp.eq.s32.totalorder %s25, 0
      %p103 = por %p101, %p102
      %p104 = scmp.ne.s32.totalorder %s96, %s98
      %p105 = scmp.eq.s32.totalorder %s30, 1
      %p106 = por %p104, %p105
      %p107 = scmp.ne.s32.totalorder %s98, %s99
      %p108 = scmp.eq.s32.totalorder %s30, 0
      %p109 = por %p107, %p108
      %p110 = scmp.ne.s32.totalorder %s98, %s99
      %p111 = scmp.eq.s32.totalorder %s31, 1
      %p112 = por %p110, %p111
      %p114 = scmp.ne.s32.totalorder %s99, %s113
      %p115 = scmp.eq.s32.totalorder %s31, 0
      %p116 = por %p114, %p115
      %s118 = sadd.s32 %s117, 1
      %p121 = scmp.eq.s32.totalorder %s25, 1
      %p122 = scmp.ne.s32.totalorder %s117, %s119
      %p123 = scmp.eq.s32.totalorder %s25, 0
      %p124 = por %p122, %p123
      %p125 = scmp.ne.s32.totalorder %s117, %s119
      %p126 = scmp.eq.s32.totalorder %s30, 1
      %p127 = por %p125, %p126
      %p128 = scmp.ne.s32.totalorder %s119, %s120
      %p129 = scmp.eq.s32.totalorder %s30, 0
      %p130 = por %p128, %p129
      %p131 = scmp.ne.s32.totalorder %s119, %s120
      %p132 = scmp.eq.s32.totalorder %s31, 1
      %p133 = por %p131, %p132
      %p135 = scmp.ne.s32.totalorder %s120, %s134
      %p136 = scmp.eq.s32.totalorder %s31, 0
      %p137 = por %p135, %p136
      %s138 = ssub.s32 %s25, %s32
      %p139 = scmp.eq.s32.totalorder %s138, 0
      %s141 = sadd.s32 %s140, 1
      %s142 = scalar_select %p139, %s140, %s141
      %p145 = pneg %p139
      %p146 = scmp.eq.s32.totalorder %s25, 1
      %p147 = por %p145, %p146
      %p148 = scmp.ne.s32.totalorder %s140, %s143
      %p149 = scmp.eq.s32.totalorder %s25, 0
      %p150 = por %p148, %p149
      %p151 = scmp.ne.s32.totalorder %s140, %s143
      %p152 = scmp.eq.s32.totalorder %s30, 1
      %p153 = por %p151, %p152
      %p154 = scmp.ne.s32.totalorder %s143, %s144
      %p155 = scmp.eq.s32.totalorder %s30, 0
      %p156 = por %p154, %p155
      %p157 = scmp.ne.s32.totalorder %s143, %s144
      %p158 = scmp.eq.s32.totalorder %s31, 1
      %p159 = por %p157, %p158
      %p161 = scmp.ne.s32.totalorder %s144, %s160
      %p162 = scmp.eq.s32.totalorder %s31, 0
      %p163 = por %p161, %p162
      %s164 = ssub.s32 %s25, %s32
      %p165 = scmp.eq.s32.totalorder %s164, 0
      %s167 = sadd.s32 %s166, 1
      %s168 = scalar_select %p165, %s166, %s167
      %p171 = pneg %p165
      %p172 = scmp.eq.s32.totalorder %s25, 1
      %p173 = por %p171, %p172
      %p174 = scmp.ne.s32.totalorder %s166, %s169
      %p175 = scmp.eq.s32.totalorder %s25, 0
      %p176 = por %p174, %p175
      %p177 = scmp.ne.s32.totalorder %s166, %s169
      %p178 = scmp.eq.s32.totalorder %s30, 1
      %p179 = por %p177, %p178
      %p180 = scmp.ne.s32.totalorder %s169, %s170
      %p181 = scmp.eq.s32.totalorder %s30, 0
      %p182 = por %p180, %p181
      %p183 = scmp.ne.s32.totalorder %s169, %s170
      %p184 = scmp.eq.s32.totalorder %s31, 1
      %p185 = por %p183, %p184
      %p187 = scmp.ne.s32.totalorder %s170, %s186
      %p188 = scmp.eq.s32.totalorder %s31, 0
      %p189 = por %p187, %p188
      %s190 = ssub.s32 %s25, %s32
      %p191 = scmp.eq.s32.totalorder %s190, 0
      %s193 = sadd.s32 %s192, 1
      %s194 = scalar_select %p191, %s192, %s193
      %p197 = pneg %p191
      %p198 = scmp.eq.s32.totalorder %s25, 1
      %p199 = por %p197, %p198
      %p200 = scmp.ne.s32.totalorder %s192, %s195
      %p201 = scmp.eq.s32.totalorder %s25, 0
      %p202 = por %p200, %p201
      %p203 = scmp.ne.s32.totalorder %s192, %s195
      %p204 = scmp.eq.s32.totalorder %s30, 1
      %p205 = por %p203, %p204
      %p206 = scmp.ne.s32.totalorder %s195, %s196
      %p207 = scmp.eq.s32.totalorder %s30, 0
      %p208 = por %p206, %p207
      %p209 = scmp.ne.s32.totalorder %s195, %s196
      %p210 = scmp.eq.s32.totalorder %s31, 1
      %p211 = por %p209, %p210
      %p213 = scmp.ne.s32.totalorder %s196, %s212
      %p214 = scmp.eq.s32.totalorder %s31, 0
      %p215 = por %p213, %p214
      %s216 = ssub.s32 %s25, %s32
      %p217 = scmp.eq.s32.totalorder %s216, 0
      %s219 = sadd.s32 %s218, 1
      %s220 = scalar_select %p217, %s218, %s219
      %p223 = pneg %p217
      %p224 = scmp.eq.s32.totalorder %s25, 1
      %p225 = por %p223, %p224
      %p226 = scmp.ne.s32.totalorder %s218, %s221
      %p227 = scmp.eq.s32.totalorder %s25, 0
      %p228 = por %p226, %p227
      %p229 = scmp.ne.s32.totalorder %s218, %s221
      %p230 = scmp.eq.s32.totalorder %s30, 1
      %p231 = por %p229, %p230
      %p232 = scmp.ne.s32.totalorder %s221, %s222
      %p233 = scmp.eq.s32.totalorder %s30, 0
      %p234 = por %p232, %p233
      %p235 = scmp.ne.s32.totalorder %s221, %s222
      %p236 = scmp.eq.s32.totalorder %s31, 1
      %p237 = por %p235, %p236
      %p239 = scmp.ne.s32.totalorder %s222, %s238
      %p240 = scmp.eq.s32.totalorder %s31, 0
      %p241 = por %p239, %p240
      %s243 = sadd.s32 %s242, 1
      %p246 = scmp.eq.s32.totalorder %s25, 1
      %p247 = scmp.ne.s32.totalorder %s242, %s244
      %p248 = scmp.eq.s32.totalorder %s25, 0
      %p249 = por %p247, %p248
      %p250 = scmp.ne.s32.totalorder %s242, %s244
      %p251 = scmp.eq.s32.totalorder %s30, 1
      %p252 = por %p250, %p251
      %p253 = scmp.ne.s32.totalorder %s244, %s245
      %p254 = scmp.eq.s32.totalorder %s30, 0
      %p255 = por %p253, %p254
      %p256 = scmp.ne.s32.totalorder %s244, %s245
      %p257 = scmp.eq.s32.totalorder %s31, 1
      %p258 = por %p256, %p257
      %p260 = scmp.ne.s32.totalorder %s245, %s259
      %p261 = scmp.eq.s32.totalorder %s31, 0
      %p262 = por %p260, %p261
      %p263 = scmp.le.s32.totalorder 1, %s25
      %p264 = scmp.lt.s32.totalorder %s25, 3
      %p265 = pnand %p263, %p264
      %p266 = pneg %p265
      // Predicated region
      $region9: #{tpu_custom_call.1} parent=5 // pred_check
        _
      $region10: #{tpu_custom_call.1} parent=5 // pred_check_branch
        %268 = sbr.rel (%p265) target = $region12
      $region11: #{tpu_custom_call.1} parent=5 // pred_region
        %s269 = ssub.s32 %s25, 1
        // Predicated region
        $region13: #{tpu_custom_call.1} parent=11 // pred_check
          %p270 = pneg %p46
        $region14: #{tpu_custom_call.1} parent=11 // pred_check_branch
          %272 = sbr.rel (%p270) target = $region16
        $region15: #{tpu_custom_call.1} parent=11 // pred_region
          %s274 = ssub.s32 256, 256
          %275 = vsyncadd [#allocation3], %s274
          %s276 = sshll.u32 [#allocation2], 4
          %s277 = int_to_ptr.vmem [resolvable:$true] %s276
          %282 = dma.hbm_to_vmem [thread:$0]  %s0, 256, %s277, [#allocation3], 128, 128, 8
        $region16: #{tpu_custom_call.1} parent=11 // pred_fallthru
          _
        // Predicated region
        $region17: #{tpu_custom_call.1} parent=11 // pred_check
          %p283 = pneg %p67
        $region18: #{tpu_custom_call.1} parent=11 // pred_check_branch
          %285 = sbr.rel (%p283) target = $region20
        $region19: #{tpu_custom_call.1} parent=11 // pred_region
          %s287 = ssub.s32 1024, 1024
          %288 = vsyncadd [#allocation6], %s287
          %s289 = sshll.u32 [#allocation5], 4
          %s290 = int_to_ptr.vmem [resolvable:$true] %s289
          %295 = dma.hbm_to_vmem [thread:$0]  %s1, 1024, %s290, [#allocation6], 64, 64, 4
        $region20: #{tpu_custom_call.1} parent=11 // pred_fallthru
          _
        // Predicated region
        $region21: #{tpu_custom_call.1} parent=11 // pred_check
          %p296 = pneg %p88
        $region22: #{tpu_custom_call.1} parent=11 // pred_check_branch
          %298 = sbr.rel (%p296) target = $region24
        $region23: #{tpu_custom_call.1} parent=11 // pred_region
          %s300 = ssub.s32 1024, 1024
          %301 = vsyncadd [#allocation6], %s300
          %s302 = sshll.u32 [#allocation7], 4
          %s303 = int_to_ptr.vmem [resolvable:$true] %s302
          %308 = dma.hbm_to_vmem [thread:$0]  %s2, 1024, %s303, [#allocation6], 64, 64, 4
        $region24: #{tpu_custom_call.1} parent=11 // pred_fallthru
          _
        // Predicated region
        $region25: #{tpu_custom_call.1} parent=11 // pred_check
          %p309 = pneg %p109
        $region26: #{tpu_custom_call.1} parent=11 // pred_check_branch
          %311 = sbr.rel (%p309) target = $region28
        $region27: #{tpu_custom_call.1} parent=11 // pred_region
          %s313 = ssub.s32 1024, 1024
          %314 = vsyncadd [#allocation9], %s313
          %s315 = sshll.u32 [#allocation8], 4
          %s316 = int_to_ptr.vmem [resolvable:$true] %s315
          %321 = dma.hbm_to_vmem [thread:$0]  %s3, 1024, %s316, [#allocation9], 64, 64, 4
        $region28: #{tpu_custom_call.1} parent=11 // pred_fallthru
          _
        // Predicated region
        $region29: #{tpu_custom_call.1} parent=11 // pred_check
          %p322 = pneg %p130
        $region30: #{tpu_custom_call.1} parent=11 // pred_check_branch
          %324 = sbr.rel (%p322) target = $region32
        $region31: #{tpu_custom_call.1} parent=11 // pred_region
          %s326 = ssub.s32 1024, 1024
          %327 = vsyncadd [#allocation9], %s326
          %s328 = sshll.u32 [#allocation10], 4
          %s329 = int_to_ptr.vmem [resolvable:$true] %s328
          %334 = dma.hbm_to_vmem [thread:$0]  %s4, 1024, %s329, [#allocation9], 64, 64, 4
        $region32: #{tpu_custom_call.1} parent=11 // pred_fallthru
          _
      $region12: #{tpu_custom_call.1} parent=5 // pred_fallthru
        _
      %p335 = scmp.lt.s32.totalorder %s25, 2
      // Predicated region
      $region33: #{tpu_custom_call.1} parent=5 // pred_check
        %p336 = pneg %p335
      $region34: #{tpu_custom_call.1} parent=5 // pred_check_branch
        %338 = sbr.rel (%p336) target = $region36
      $region35: #{tpu_custom_call.1} parent=5 // pred_region
        // Predicated region
        $region37: #{tpu_custom_call.1} parent=35 // pred_check
          %p339 = pneg %p150
        $region38: #{tpu_custom_call.1} parent=35 // pred_check_branch
          %341 = sbr.rel (%p339) target = $region40
        $region39: #{tpu_custom_call.1} parent=35 // pred_region
          %s342 = sand.u32 %s25, 1
          %s343 = scalar_lea.sflag [#allocation12], %s342
          %s344 = sand.u32 %s140, 1
          %s345 = smul.addr %s344, 512
          %s346 = scalar_lea.vmem [#allocation11], %s345
          %s348 = ssub.s32 8192, 8192
          %349 = vsyncadd %s343, %s348
          %s350 = smul.addr %s25, 128
          %s351 = smul.addr %s350, 64
          %s352 = scalar_lea.hbm %s5, %s351
          %s353 = sshll.u32 %s346, 4
          %s354 = int_to_ptr.vmem [resolvable:$true] %s353
          %359 = dma.hbm_to_vmem [thread:$0]  %s352, 8192, %s354, %s343, 512, 512, 32
        $region40: #{tpu_custom_call.1} parent=35 // pred_fallthru
          _
        // Predicated region
        $region41: #{tpu_custom_call.1} parent=35 // pred_check
          %p360 = pneg %p176
        $region42: #{tpu_custom_call.1} parent=35 // pred_check_branch
          %362 = sbr.rel (%p360) target = $region44
        $region43: #{tpu_custom_call.1} parent=35 // pred_region
          %s363 = sand.u32 %s25, 1
          %s364 = scalar_lea.sflag [#allocation12], %s363
          %s365 = sand.u32 %s166, 1
          %s366 = smul.addr %s365, 128
          %s367 = scalar_lea.vmem [#allocation13], %s366
          %s369 = ssub.s32 2048, 2048
          %370 = vsyncadd %s364, %s369
          %s371 = smul.addr %s25, 32
          %s372 = smul.addr %s371, 64
          %s373 = scalar_lea.hbm %s6, %s372
          %s374 = sshll.u32 %s367, 4
          %s375 = int_to_ptr.vmem [resolvable:$true] %s374
          %380 = dma.hbm_to_vmem [thread:$0]  %s373, 2048, %s375, %s364, 64, 64, 4
        $region44: #{tpu_custom_call.1} parent=35 // pred_fallthru
          _
        // Predicated region
        $region45: #{tpu_custom_call.1} parent=35 // pred_check
          %p381 = pneg %p202
        $region46: #{tpu_custom_call.1} parent=35 // pred_check_branch
          %383 = sbr.rel (%p381) target = $region48
        $region47: #{tpu_custom_call.1} parent=35 // pred_region
          %s384 = sand.u32 %s25, 1
          %s385 = scalar_lea.sflag [#allocation15], %s384
          %s386 = sand.u32 %s192, 1
          %s387 = smul.addr %s386, 15
          %s388 = scalar_lea.vmem [#allocation14], %s387
          %s390 = ssub.s32 240, 240
          %391 = vsyncadd %s385, %s390
          %s392 = smul.addr %s25, 15
          %s393 = smul.addr %s392, 16
          %s394 = scalar_lea.hbm %s7, %s393
          %s396 = sshll.u32 %s388, 4
          %s397 = int_to_ptr.vmem [resolvable:$true] %s396
          %399 = dma.hbm_to_vmem [thread:$0]  %s394, 240, %s397, %s385
        $region48: #{tpu_custom_call.1} parent=35 // pred_fallthru
          _
        // Predicated region
        $region49: #{tpu_custom_call.1} parent=35 // pred_check
          %p400 = pneg %p228
        $region50: #{tpu_custom_call.1} parent=35 // pred_check_branch
          %402 = sbr.rel (%p400) target = $region52
        $region51: #{tpu_custom_call.1} parent=35 // pred_region
          %s403 = sand.u32 %s25, 1
          %s404 = scalar_lea.sflag [#allocation15], %s403
          %s405 = sand.u32 %s218, 1
          %s406 = smul.addr %s405, 32
          %s407 = scalar_lea.vmem [#allocation16], %s406
          %s409 = ssub.s32 512, 512
          %410 = vsyncadd %s404, %s409
          %s411 = smul.addr %s25, 8
          %s412 = smul.addr %s411, 64
          %s413 = scalar_lea.hbm %s8, %s412
          %s414 = sshll.u32 %s407, 4
          %s415 = int_to_ptr.vmem [resolvable:$true] %s414
          %420 = dma.hbm_to_vmem [thread:$0]  %s413, 512, %s415, %s404, 128, 128, 8
        $region52: #{tpu_custom_call.1} parent=35 // pred_fallthru
          _
      $region36: #{tpu_custom_call.1} parent=5 // pred_fallthru
        _
      %p421 = scmp.le.s32.totalorder 1, %s25
      %p422 = scmp.lt.s32.totalorder %s25, 3
      %p423 = pnand %p421, %p422
      %p424 = pneg %p423
      // Predicated region
      $region53: #{tpu_custom_call.1} parent=5 // pred_check
        _
      $region54: #{tpu_custom_call.1} parent=5 // pred_check_branch
        %426 = sbr.rel (%p423) target = $region56
      $region55: #{tpu_custom_call.1} parent=5 // pred_region
        %s427 = ssub.s32 %s25, 1
        // Predicated region
        $region57: #{tpu_custom_call.1} parent=55 // pred_check
          %p428 = pneg %p46
        $region58: #{tpu_custom_call.1} parent=55 // pred_check_branch
          %430 = sbr.rel (%p428) target = $region60
        $region59: #{tpu_custom_call.1} parent=55 // pred_region
          %431 = dma.done [#allocation3], 256
        $region60: #{tpu_custom_call.1} parent=55 // pred_fallthru
          _
        // Predicated region
        $region61: #{tpu_custom_call.1} parent=55 // pred_check
          %p432 = pneg %p67
        $region62: #{tpu_custom_call.1} parent=55 // pred_check_branch
          %434 = sbr.rel (%p432) target = $region64
        $region63: #{tpu_custom_call.1} parent=55 // pred_region
          %435 = dma.done [#allocation6], 1024
        $region64: #{tpu_custom_call.1} parent=55 // pred_fallthru
          _
        // Predicated region
        $region65: #{tpu_custom_call.1} parent=55 // pred_check
          %p436 = pneg %p88
        $region66: #{tpu_custom_call.1} parent=55 // pred_check_branch
          %438 = sbr.rel (%p436) target = $region68
        $region67: #{tpu_custom_call.1} parent=55 // pred_region
          %439 = dma.done [#allocation6], 1024
        $region68: #{tpu_custom_call.1} parent=55 // pred_fallthru
          _
        // Predicated region
        $region69: #{tpu_custom_call.1} parent=55 // pred_check
          %p440 = pneg %p109
        $region70: #{tpu_custom_call.1} parent=55 // pred_check_branch
          %442 = sbr.rel (%p440) target = $region72
        $region71: #{tpu_custom_call.1} parent=55 // pred_region
          %443 = dma.done [#allocation9], 1024
        $region72: #{tpu_custom_call.1} parent=55 // pred_fallthru
          _
        // Predicated region
        $region73: #{tpu_custom_call.1} parent=55 // pred_check
          %p444 = pneg %p130
        $region74: #{tpu_custom_call.1} parent=55 // pred_check_branch
          %446 = sbr.rel (%p444) target = $region76
        $region75: #{tpu_custom_call.1} parent=55 // pred_region
          %447 = dma.done [#allocation9], 1024
        $region76: #{tpu_custom_call.1} parent=55 // pred_fallthru
          _
        %s448 = sand.u32 %s30, 1
        %s449 = scalar_lea.sflag [#allocation12], %s448
        %s450 = sand.u32 %s143, 1
        %s451 = smul.addr %s450, 512
        %s452 = scalar_lea.vmem [#allocation11], %s451
        // Predicated region
        $region77: #{tpu_custom_call.1} parent=55 // pred_check
          %p453 = pneg %p156
        $region78: #{tpu_custom_call.1} parent=55 // pred_check_branch
          %455 = sbr.rel (%p453) target = $region80
        $region79: #{tpu_custom_call.1} parent=55 // pred_region
          %456 = dma.done %s449, 8192
        $region80: #{tpu_custom_call.1} parent=55 // pred_fallthru
          _
        %s457 = sand.u32 %s30, 1
        %s458 = scalar_lea.sflag [#allocation12], %s457
        %s459 = sand.u32 %s169, 1
        %s460 = smul.addr %s459, 128
        %s461 = scalar_lea.vmem [#allocation13], %s460
        // Predicated region
        $region81: #{tpu_custom_call.1} parent=55 // pred_check
          %p462 = pneg %p182
        $region82: #{tpu_custom_call.1} parent=55 // pred_check_branch
          %464 = sbr.rel (%p462) target = $region84
        $region83: #{tpu_custom_call.1} parent=55 // pred_region
          %465 = dma.done %s458, 2048
        $region84: #{tpu_custom_call.1} parent=55 // pred_fallthru
          _
        %s466 = sand.u32 %s30, 1
        %s467 = scalar_lea.sflag [#allocation15], %s466
        %s468 = sand.u32 %s195, 1
        %s469 = smul.addr %s468, 15
        %s470 = scalar_lea.vmem [#allocation14], %s469
        // Predicated region
        $region85: #{tpu_custom_call.1} parent=55 // pred_check
          %p471 = pneg %p208
        $region86: #{tpu_custom_call.1} parent=55 // pred_check_branch
          %473 = sbr.rel (%p471) target = $region88
        $region87: #{tpu_custom_call.1} parent=55 // pred_region
          %474 = dma.done %s467, 240
        $region88: #{tpu_custom_call.1} parent=55 // pred_fallthru
          _
        %s475 = sand.u32 %s30, 1
        %s476 = scalar_lea.sflag [#allocation15], %s475
        %s477 = sand.u32 %s221, 1
        %s478 = smul.addr %s477, 32
        %s479 = scalar_lea.vmem [#allocation16], %s478
        // Predicated region
        $region89: #{tpu_custom_call.1} parent=55 // pred_check
          %p480 = pneg %p234
        $region90: #{tpu_custom_call.1} parent=55 // pred_check_branch
          %482 = sbr.rel (%p480) target = $region92
        $region91: #{tpu_custom_call.1} parent=55 // pred_region
          %483 = dma.done %s476, 512
        $region92: #{tpu_custom_call.1} parent=55 // pred_fallthru
          _
        %p484 = pneg %p46
        %p485 = pneg %p43
        %p486 = pneg %p67
        %p487 = pneg %p64
        %p488 = pneg %p88
        %p489 = pneg %p85
        %p490 = pneg %p109
        %p491 = pneg %p106
        %p492 = pneg %p130
        %p493 = pneg %p127
        %s494 = sand.u32 %s30, 1
        %s495 = scalar_lea.sflag [#allocation12], %s494
        %s496 = sand.u32 %s143, 1
        %s497 = smul.addr %s496, 512
        %s498 = scalar_lea.vmem [#allocation11], %s497
        %p499 = pneg %p156
        %p500 = pneg %p153
        %s501 = sand.u32 %s30, 1
        %s502 = scalar_lea.sflag [#allocation12], %s501
        %s503 = sand.u32 %s169, 1
        %s504 = smul.addr %s503, 128
        %s505 = scalar_lea.vmem [#allocation13], %s504
        %p506 = pneg %p182
        %p507 = pneg %p179
        %s508 = sand.u32 %s30, 1
        %s509 = scalar_lea.sflag [#allocation15], %s508
        %s510 = sand.u32 %s195, 1
        %s511 = smul.addr %s510, 15
        %s512 = scalar_lea.vmem [#allocation14], %s511
        %p513 = pneg %p208
        %p514 = pneg %p205
        %s515 = sand.u32 %s30, 1
        %s516 = scalar_lea.sflag [#allocation15], %s515
        %s517 = sand.u32 %s221, 1
        %s518 = smul.addr %s517, 32
        %s519 = scalar_lea.vmem [#allocation16], %s518
        %p520 = pneg %p234
        %p521 = pneg %p231
        %p522 = pneg %p255
        %p523 = pneg %p252
        %p525 = scmp.eq.s32.totalorder %s30, 0
        // Predicated region
        $region93: #{tpu_custom_call.1} parent=55 // pred_check
          %p526 = pneg %p525
        $region94: #{tpu_custom_call.1} parent=55 // pred_check_branch
          %528 = sbr.rel (%p526) target = $region96
        $region95: #{tpu_custom_call.1} parent=55 // pred_region
          %v529 = vld [vmem:[#allocation2] sm:$0xff]
          %v530 = vld [vmem:[#allocation2 + $0x8] sm:$0xff]
          %531 = vst [vmem:[#allocation17] sm:$0xff] %v529
          %532 = vst [vmem:[#allocation17 + $0x8] sm:$0xff] %v530
        $region96: #{tpu_custom_call.1} parent=55 // pred_fallthru
          _
        %v533 = vld [vmem:[#allocation17] sm:$0xff]
        %v534 = vld [vmem:[#allocation17 + $0x8] sm:$0xff]
        %v535 = vld [vmem:[%s479] sm:$0xff]
        %v536 = vld [vmem:[%s479 + $0x8] sm:$0xff]
        %v537 = vld [vmem:[%s479 + $0x10] sm:$0xff]
        %v538 = vld [vmem:[%s479 + $0x18] sm:$0xff]
        %v539 = vld [vmem:[#allocation5] sm:$0xf]
        %v540 = vld [vmem:[#allocation5 + $0x4] sm:$0xf]
        %v541 = vld [vmem:[#allocation5 + $0x8] sm:$0xf]
        %v542 = vld [vmem:[#allocation5 + $0xc] sm:$0xf]
        %v543 = vld [vmem:[#allocation5 + $0x10] sm:$0xf]
        %v544 = vld [vmem:[#allocation5 + $0x14] sm:$0xf]
        %v545 = vld [vmem:[#allocation5 + $0x18] sm:$0xf]
        %v546 = vld [vmem:[#allocation5 + $0x1c] sm:$0xf]
        %v547 = vld [vmem:[#allocation5 + $0x20] sm:$0xf]
        %v548 = vld [vmem:[#allocation5 + $0x24] sm:$0xf]
        %v549 = vld [vmem:[#allocation5 + $0x28] sm:$0xf]
        %v550 = vld [vmem:[#allocation5 + $0x2c] sm:$0xf]
        %v551 = vld [vmem:[#allocation5 + $0x30] sm:$0xf]
        %v552 = vld [vmem:[#allocation5 + $0x34] sm:$0xf]
        %v553 = vld [vmem:[#allocation5 + $0x38] sm:$0xf]
        %v554 = vld [vmem:[#allocation5 + $0x3c] sm:$0xf]
        %v555 = vld [vmem:[#allocation7] sm:$0xf]
        %v556 = vld [vmem:[#allocation7 + $0x4] sm:$0xf]
        %v557 = vld [vmem:[#allocation7 + $0x8] sm:$0xf]
        %v558 = vld [vmem:[#allocation7 + $0xc] sm:$0xf]
        %v559 = vld [vmem:[#allocation7 + $0x10] sm:$0xf]
        %v560 = vld [vmem:[#allocation7 + $0x14] sm:$0xf]
        %v561 = vld [vmem:[#allocation7 + $0x18] sm:$0xf]
        %v562 = vld [vmem:[#allocation7 + $0x1c] sm:$0xf]
        %v563 = vld [vmem:[#allocation7 + $0x20] sm:$0xf]
        %v564 = vld [vmem:[#allocation7 + $0x24] sm:$0xf]
        %v565 = vld [vmem:[#allocation7 + $0x28] sm:$0xf]
        %v566 = vld [vmem:[#allocation7 + $0x2c] sm:$0xf]
        %v567 = vld [vmem:[#allocation7 + $0x30] sm:$0xf]
        %v568 = vld [vmem:[#allocation7 + $0x34] sm:$0xf]
        %v569 = vld [vmem:[#allocation7 + $0x38] sm:$0xf]
        %v570 = vld [vmem:[#allocation7 + $0x3c] sm:$0xf]
        %v571 = vld [vmem:[#allocation8] sm:$0xf]
        %v572 = vld [vmem:[#allocation8 + $0x4] sm:$0xf]
        %v573 = vld [vmem:[#allocation8 + $0x8] sm:$0xf]
        %v574 = vld [vmem:[#allocation8 + $0xc] sm:$0xf]
        %v575 = vld [vmem:[#allocation8 + $0x10] sm:$0xf]
        %v576 = vld [vmem:[#allocation8 + $0x14] sm:$0xf]
        %v577 = vld [vmem:[#allocation8 + $0x18] sm:$0xf]
        %v578 = vld [vmem:[#allocation8 + $0x1c] sm:$0xf]
        %v579 = vld [vmem:[#allocation8 + $0x20] sm:$0xf]
        %v580 = vld [vmem:[#allocation8 + $0x24] sm:$0xf]
        %v581 = vld [vmem:[#allocation8 + $0x28] sm:$0xf]
        %v582 = vld [vmem:[#allocation8 + $0x2c] sm:$0xf]
        %v583 = vld [vmem:[#allocation8 + $0x30] sm:$0xf]
        %v584 = vld [vmem:[#allocation8 + $0x34] sm:$0xf]
        %v585 = vld [vmem:[#allocation8 + $0x38] sm:$0xf]
        %v586 = vld [vmem:[#allocation8 + $0x3c] sm:$0xf]
        %v587 = vld [vmem:[#allocation10] sm:$0xf]
        %v588 = vld [vmem:[#allocation10 + $0x4] sm:$0xf]
        %v589 = vld [vmem:[#allocation10 + $0x8] sm:$0xf]
        %v590 = vld [vmem:[#allocation10 + $0xc] sm:$0xf]
        %v591 = vld [vmem:[#allocation10 + $0x10] sm:$0xf]
        %v592 = vld [vmem:[#allocation10 + $0x14] sm:$0xf]
        %v593 = vld [vmem:[#allocation10 + $0x18] sm:$0xf]
        %v594 = vld [vmem:[#allocation10 + $0x1c] sm:$0xf]
        %v595 = vld [vmem:[#allocation10 + $0x20] sm:$0xf]
        %v596 = vld [vmem:[#allocation10 + $0x24] sm:$0xf]
        %v597 = vld [vmem:[#allocation10 + $0x28] sm:$0xf]
        %v598 = vld [vmem:[#allocation10 + $0x2c] sm:$0xf]
        %v599 = vld [vmem:[#allocation10 + $0x30] sm:$0xf]
        %v600 = vld [vmem:[#allocation10 + $0x34] sm:$0xf]
        %v601 = vld [vmem:[#allocation10 + $0x38] sm:$0xf]
        %v602 = vld [vmem:[#allocation10 + $0x3c] sm:$0xf]
        %v603 = vld [vmem:[%s452] sm:$0xff]
        %v604 = vld [vmem:[%s452 + $0x8] sm:$0xf]
        %v605 = vld [vmem:[%s452 + $0x20] sm:$0xff]
        %v606 = vld [vmem:[%s452 + $0x28] sm:$0xf]
        %v607 = vld [vmem:[%s452 + $0x40] sm:$0xff]
        %v608 = vld [vmem:[%s452 + $0x48] sm:$0xf]
        %v609 = vld [vmem:[%s452 + $0x60] sm:$0xff]
        %v610 = vld [vmem:[%s452 + $0x68] sm:$0xf]
        %v611 = vld [vmem:[%s452 + $0x80] sm:$0xff]
        %v612 = vld [vmem:[%s452 + $0x88] sm:$0xf]
        %v613 = vld [vmem:[%s452 + $0xa0] sm:$0xff]
        %v614 = vld [vmem:[%s452 + $0xa8] sm:$0xf]
        %v615 = vld [vmem:[%s452 + $0xc0] sm:$0xff]
        %v616 = vld [vmem:[%s452 + $0xc8] sm:$0xf]
        %v617 = vld [vmem:[%s452 + $0xe0] sm:$0xff]
        %v618 = vld [vmem:[%s452 + $0xe8] sm:$0xf]
        %v619 = vld [vmem:[%s452 + $0x100] sm:$0xff]
        %v620 = vld [vmem:[%s452 + $0x108] sm:$0xf]
        %v621 = vld [vmem:[%s452 + $0x120] sm:$0xff]
        %v622 = vld [vmem:[%s452 + $0x128] sm:$0xf]
        %v623 = vld [vmem:[%s452 + $0x140] sm:$0xff]
        %v624 = vld [vmem:[%s452 + $0x148] sm:$0xf]
        %v625 = vld [vmem:[%s452 + $0x160] sm:$0xff]
        %v626 = vld [vmem:[%s452 + $0x168] sm:$0xf]
        %v627 = vld [vmem:[%s452 + $0x180] sm:$0xff]
        %v628 = vld [vmem:[%s452 + $0x188] sm:$0xf]
        %v629 = vld [vmem:[%s452 + $0x1a0] sm:$0xff]
        %v630 = vld [vmem:[%s452 + $0x1a8] sm:$0xf]
        %v631 = vld [vmem:[%s452 + $0x1c0] sm:$0xff]
        %v632 = vld [vmem:[%s452 + $0x1c8] sm:$0xf]
        %v633 = vld [vmem:[%s452 + $0x1e0] sm:$0xff]
        %v634 = vld [vmem:[%s452 + $0x1e8] sm:$0xf]
        %v635 = vpack.c.bf16 %v534, %v533
        %v636 = vld [vmem:[%s470] sm:$0x7]
        %v638 = vlaneseq
        %v639 = vshrl.u32 %v638, 7
        %v640 = vsub.s32 0, %v639
        %v641 = vrot.slane %v636, %v640
        %v642 = vlaneseq
        %v643 = vshrl.u32 %v642, 7
        %v644 = vsub.s32 1, %v643
        %v645 = vrot.slane %v636, %v644
        %v646 = vlaneseq
        %v647 = vshrl.u32 %v646, 7
        %v648 = vsub.s32 2, %v647
        %v649 = vrot.slane %v636, %v648
        %v685 = vunpack.c.l.b16 %v603
        %v686 = vunpack.c.h.b16 %v603
        %v687 = vunpack.c.l.b16 %v604
        %v688 = vunpack.c.l.b16 %v605
        %v689 = vunpack.c.h.b16 %v605
        %v690 = vunpack.c.l.b16 %v606
        %v691 = vunpack.c.l.b16 %v607
        %v692 = vunpack.c.h.b16 %v607
        %v693 = vunpack.c.l.b16 %v608
        %v694 = vunpack.c.l.b16 %v609
        %v695 = vunpack.c.h.b16 %v609
        %v696 = vunpack.c.l.b16 %v610
        %v697 = vunpack.c.l.b16 %v611
        %v698 = vunpack.c.h.b16 %v611
        %v699 = vunpack.c.l.b16 %v612
        %v700 = vunpack.c.l.b16 %v613
        %v701 = vunpack.c.h.b16 %v613
        %v702 = vunpack.c.l.b16 %v614
        %v703 = vunpack.c.l.b16 %v615
        %v704 = vunpack.c.h.b16 %v615
        %v705 = vunpack.c.l.b16 %v616
        %v706 = vunpack.c.l.b16 %v617
        %v707 = vunpack.c.h.b16 %v617
        %v708 = vunpack.c.l.b16 %v618
        %v709 = vunpack.c.l.b16 %v619
        %v710 = vunpack.c.h.b16 %v619
        %v711 = vunpack.c.l.b16 %v620
        %v712 = vunpack.c.l.b16 %v621
        %v713 = vunpack.c.h.b16 %v621
        %v714 = vunpack.c.l.b16 %v622
        %v715 = vunpack.c.l.b16 %v623
        %v716 = vunpack.c.h.b16 %v623
        %v717 = vunpack.c.l.b16 %v624
        %v718 = vunpack.c.l.b16 %v625
        %v719 = vunpack.c.h.b16 %v625
        %v720 = vunpack.c.l.b16 %v626
        %v721 = vunpack.c.l.b16 %v627
        %v722 = vunpack.c.h.b16 %v627
        %v723 = vunpack.c.l.b16 %v628
        %v724 = vunpack.c.l.b16 %v629
        %v725 = vunpack.c.h.b16 %v629
        %v726 = vunpack.c.l.b16 %v630
        %v727 = vunpack.c.l.b16 %v631
        %v728 = vunpack.c.h.b16 %v631
        %v729 = vunpack.c.l.b16 %v632
        %v730 = vunpack.c.l.b16 %v633
        %v731 = vunpack.c.h.b16 %v633
        %v732 = vunpack.c.l.b16 %v634
        %v733 = vpack.c.b16 %v688, %v685
        %v734 = vpack.c.b16 %v689, %v686
        %v735 = vpack.c.b16 %v690, %v687
        %v736 = vpack.c.b16 %v694, %v691
        %v737 = vpack.c.b16 %v695, %v692
        %v738 = vpack.c.b16 %v696, %v693
        %v739 = vpack.c.b16 %v700, %v697
        %v740 = vpack.c.b16 %v701, %v698
        %v741 = vpack.c.b16 %v702, %v699
        %v742 = vpack.c.b16 %v706, %v703
        %v743 = vpack.c.b16 %v707, %v704
        %v744 = vpack.c.b16 %v708, %v705
        %v745 = vpack.c.b16 %v712, %v709
        %v746 = vpack.c.b16 %v713, %v710
        %v747 = vpack.c.b16 %v714, %v711
        %v748 = vpack.c.b16 %v718, %v715
        %v749 = vpack.c.b16 %v719, %v716
        %v750 = vpack.c.b16 %v720, %v717
        %v751 = vpack.c.b16 %v724, %v721
        %v752 = vpack.c.b16 %v725, %v722
        %v753 = vpack.c.b16 %v726, %v723
        %v754 = vpack.c.b16 %v730, %v727
        %v755 = vpack.c.b16 %v731, %v728
        %v756 = vpack.c.b16 %v732, %v729
        %781 = vmatprep.subr.bf16.mxu0 %v734
        %782 = vmatpush1.bf16.msra.mxu0 %v733
        %783 = vmatprep.subr.bf16.mxu0 %v737
        %784 = vmatpush1.bf16.msra.mxu0 %v736
        %785 = vmatprep.subr.bf16.mxu0 %v740
        %786 = vmatpush1.bf16.msra.mxu0 %v739
        %787 = vmatprep.subr.bf16.mxu0 %v743
        %788 = vmatpush1.bf16.msra.mxu0 %v742
        %789 = vmatprep.subr.bf16.mxu0 %v746
        %790 = vmatpush1.bf16.msra.mxu0 %v745
        %791 = vmatprep.subr.bf16.mxu0 %v749
        %792 = vmatpush1.bf16.msra.mxu0 %v748
        %793 = vmatprep.subr.bf16.mxu0 %v752
        %794 = vmatpush1.bf16.msra.mxu0 %v751
        %795 = vmatprep.subr.bf16.mxu0 %v755
        %796 = vmatpush1.bf16.msra.mxu0 %v754
        %797 = vmatprep.subr.bf16.mxu0 0
        %798 = vmatpush1.bf16.msra.mxu0 0
        %799 = vmatprep.subr.bf16.mxu0 0
        %800 = vmatpush1.bf16.msra.mxu0 0
        %801 = vmatprep.subr.bf16.mxu0 0
        %802 = vmatpush1.bf16.msra.mxu0 0
        %803 = vmatprep.subr.bf16.mxu0 0
        %804 = vmatpush1.bf16.msra.mxu0 0
        %805 = vmatprep.subr.bf16.mxu0 0
        %806 = vmatpush1.bf16.msra.mxu0 0
        %807 = vmatprep.subr.bf16.mxu0 0
        %808 = vmatpush1.bf16.msra.mxu0 0
        %809 = vmatprep.subr.bf16.mxu0 0
        %810 = vmatpush1.bf16.msra.mxu0 0
        %811 = vmatprep.subr.bf16.mxu0 0
        %812 = vmatpush1.bf16.msra.mxu0 0
        %813 = vmatprep.mubr.bf16.mxu0 0
        %814 = vmatmul.mubr.bf16.gmra.mrb[0].mxu0 %v635
        %v815 = vpop.f32.mrb[0].mxu0
        %v816 = vadd.f32 %v641, %v815
        %v817 = vpop.f32.mrb[0].mxu0
        %v818 = vadd.f32 %v645, %v817
        %v819 = vpop.f32.mrb[0].mxu0
        %v820 = vadd.f32 %v641, %v819
        %v821 = vpop.f32.mrb[0].mxu0
        %v822 = vadd.f32 %v645, %v821
        %823 = vdwg.mxu0
        %824 = vmatprep.subr.bf16.mxu0 0
        %825 = vmatpush1.bf16.msra.mxu0 %v735
        %826 = vmatprep.subr.bf16.mxu0 0
        %827 = vmatpush1.bf16.msra.mxu0 %v738
        %828 = vmatprep.subr.bf16.mxu0 0
        %829 = vmatpush1.bf16.msra.mxu0 %v741
        %830 = vmatprep.subr.bf16.mxu0 0
        %831 = vmatpush1.bf16.msra.mxu0 %v744
        %832 = vmatprep.subr.bf16.mxu0 0
        %833 = vmatpush1.bf16.msra.mxu0 %v747
        %834 = vmatprep.subr.bf16.mxu0 0
        %835 = vmatpush1.bf16.msra.mxu0 %v750
        %836 = vmatprep.subr.bf16.mxu0 0
        %837 = vmatpush1.bf16.msra.mxu0 %v753
        %838 = vmatprep.subr.bf16.mxu0 0
        %839 = vmatpush1.bf16.msra.mxu0 %v756
        %840 = vmatprep.subr.bf16.mxu0 0
        %841 = vmatpush1.bf16.msra.mxu0 0
        %842 = vmatprep.subr.bf16.mxu0 0
        %843 = vmatpush1.bf16.msra.mxu0 0
        %844 = vmatprep.subr.bf16.mxu0 0
        %845 = vmatpush1.bf16.msra.mxu0 0
        %846 = vmatprep.subr.bf16.mxu0 0
        %847 = vmatpush1.bf16.msra.mxu0 0
        %848 = vmatprep.subr.bf16.mxu0 0
        %849 = vmatpush1.bf16.msra.mxu0 0
        %850 = vmatprep.subr.bf16.mxu0 0
        %851 = vmatpush1.bf16.msra.mxu0 0
        %852 = vmatprep.subr.bf16.mxu0 0
        %853 = vmatpush1.bf16.msra.mxu0 0
        %854 = vmatprep.subr.bf16.mxu0 0
        %855 = vmatpush1.bf16.msra.mxu0 0
        %856 = vmatprep.mubr.bf16.mxu0 0
        %857 = vmatmul.mubr.bf16.gmra.mrb[0].mxu0 %v635
        %v858 = vpop.f32.mrb[0].mxu0
        %v859 = vadd.f32 %v649, %v858
        %v860 = vpop.f32.mrb[0].mxu0
        %v861 = vpop.f32.mrb[0].mxu0
        %v862 = vadd.f32 %v649, %v861
        %v863 = vpop.f32.mrb[0].mxu0
        %864 = vdwg.mxu0
        %v865 = vld [vmem:[%s452 + $0xc] sm:$0xf]
        %v866 = vld [vmem:[%s452 + $0x2c] sm:$0xf]
        %v867 = vld [vmem:[%s452 + $0x4c] sm:$0xf]
        %v868 = vld [vmem:[%s452 + $0x6c] sm:$0xf]
        %v869 = vld [vmem:[%s452 + $0x8c] sm:$0xf]
        %v870 = vld [vmem:[%s452 + $0xac] sm:$0xf]
        %v871 = vld [vmem:[%s452 + $0xcc] sm:$0xf]
        %v872 = vld [vmem:[%s452 + $0xec] sm:$0xf]
        %v873 = vld [vmem:[%s452 + $0x10c] sm:$0xf]
        %v874 = vld [vmem:[%s452 + $0x12c] sm:$0xf]
        %v875 = vld [vmem:[%s452 + $0x14c] sm:$0xf]
        %v876 = vld [vmem:[%s452 + $0x16c] sm:$0xf]
        %v877 = vld [vmem:[%s452 + $0x18c] sm:$0xf]
        %v878 = vld [vmem:[%s452 + $0x1ac] sm:$0xf]
        %v879 = vld [vmem:[%s452 + $0x1cc] sm:$0xf]
        %v880 = vld [vmem:[%s452 + $0x1ec] sm:$0xf]
        %v881 = vld [vmem:[%s470 + $0x3] sm:$0x1]
        %v882 = vmul.f32 %v816, 0.25
        %v883 = vmul.f32 %v820, 0.25
        %v884 = vpack.c.bf16 %v882, %v882
        %v885 = vpack.c.bf16 %v883, %v883
        %v886 = vpack.c.bf16 %v818, %v818
        %v887 = vpack.c.bf16 %v822, %v822
        %v888 = vpack.c.bf16 %v859, %v859
        %v889 = vpack.c.bf16 %v862, %v862
        %v892 = vrot.slane %v886, 4
        %v893 = vrot.slane %v887, 4
        %vm894 = vcmask 1043456
        %v897 = vsel %vm894, %v886, %v892
        %v901 = vsel %vm894, %v887, %v893
        %v919 = vunpack.c.l.b16 %v539
        %v920 = vunpack.c.l.b16 %v540
        %v921 = vunpack.c.l.b16 %v541
        %v922 = vunpack.c.l.b16 %v542
        %v923 = vunpack.c.l.b16 %v543
        %v924 = vunpack.c.l.b16 %v544
        %v925 = vunpack.c.l.b16 %v545
        %v926 = vunpack.c.l.b16 %v546
        %v927 = vunpack.c.l.b16 %v547
        %v928 = vunpack.c.l.b16 %v548
        %v929 = vunpack.c.l.b16 %v549
        %v930 = vunpack.c.l.b16 %v550
        %v931 = vunpack.c.l.b16 %v551
        %v932 = vunpack.c.l.b16 %v552
        %v933 = vunpack.c.l.b16 %v553
        %v934 = vunpack.c.l.b16 %v554
        %v935 = vpack.c.b16 %v920, %v919
        %v936 = vpack.c.b16 %v922, %v921
        %v937 = vpack.c.b16 %v924, %v923
        %v938 = vpack.c.b16 %v926, %v925
        %v939 = vpack.c.b16 %v928, %v927
        %v940 = vpack.c.b16 %v930, %v929
        %v941 = vpack.c.b16 %v932, %v931
        %v942 = vpack.c.b16 %v934, %v933
        %v951 = vmul.bf16 %v897, %v935
        %v952 = vmul.bf16 %v897, %v936
        %v953 = vmul.bf16 %v897, %v937
        %v954 = vmul.bf16 %v897, %v938
        %v955 = vmul.bf16 %v897, %v939
        %v956 = vmul.bf16 %v897, %v940
        %v957 = vmul.bf16 %v897, %v941
        %v958 = vmul.bf16 %v897, %v942
        %v959 = vmul.bf16 %v901, %v935
        %v960 = vmul.bf16 %v901, %v936
        %v961 = vmul.bf16 %v901, %v937
        %v962 = vmul.bf16 %v901, %v938
        %v963 = vmul.bf16 %v901, %v939
        %v964 = vmul.bf16 %v901, %v940
        %v965 = vmul.bf16 %v901, %v941
        %v966 = vmul.bf16 %v901, %v942
        %v969 = vrot.slane %v888, 4
        %v970 = vrot.slane %v889, 4
        %v973 = vsel %vm894, %v888, %v969
        %v977 = vsel %vm894, %v889, %v970
        %v979 = vmul.bf16 %v973, %v935
        %v980 = vmul.bf16 %v973, %v936
        %v981 = vmul.bf16 %v973, %v937
        %v982 = vmul.bf16 %v973, %v938
        %v983 = vmul.bf16 %v973, %v939
        %v984 = vmul.bf16 %v973, %v940
        %v985 = vmul.bf16 %v973, %v941
        %v986 = vmul.bf16 %v973, %v942
        %v987 = vmul.bf16 %v977, %v935
        %v988 = vmul.bf16 %v977, %v936
        %v989 = vmul.bf16 %v977, %v937
        %v990 = vmul.bf16 %v977, %v938
        %v991 = vmul.bf16 %v977, %v939
        %v992 = vmul.bf16 %v977, %v940
        %v993 = vmul.bf16 %v977, %v941
        %v994 = vmul.bf16 %v977, %v942
        %995 = vmatprep.subr.bf16.mxu0 0
        %996 = vmatpush1.bf16.xpose.msra.mxu0 %v951
        %997 = vmatprep.subr.bf16.mxu0 0
        %998 = vmatpush1.bf16.xpose.msra.mxu0 %v952
        %999 = vmatprep.subr.bf16.mxu0 0
        %1000 = vmatpush1.bf16.xpose.msra.mxu0 %v953
        %1001 = vmatprep.subr.bf16.mxu0 0
        %1002 = vmatpush1.bf16.xpose.msra.mxu0 %v954
        %1003 = vmatprep.subr.bf16.mxu0 0
        %1004 = vmatpush1.bf16.xpose.msra.mxu0 %v955
        %1005 = vmatprep.subr.bf16.mxu0 0
        %1006 = vmatpush1.bf16.xpose.msra.mxu0 %v956
        %1007 = vmatprep.subr.bf16.mxu0 0
        %1008 = vmatpush1.bf16.xpose.msra.mxu0 %v957
        %1009 = vmatprep.subr.bf16.mxu0 0
        %1010 = vmatpush1.bf16.xpose.msra.mxu0 %v958
        %1011 = vmatprep.subr.bf16.mxu0 0
        %1012 = vmatpush1.bf16.xpose.msra.mxu0 0
        %1013 = vmatprep.subr.bf16.mxu0 0
        %1014 = vmatpush1.bf16.xpose.msra.mxu0 0
        %1015 = vmatprep.subr.bf16.mxu0 0
        %1016 = vmatpush1.bf16.xpose.msra.mxu0 0
        %1017 = vmatprep.subr.bf16.mxu0 0
        %1018 = vmatpush1.bf16.xpose.msra.mxu0 0
        %1019 = vmatprep.subr.bf16.mxu0 0
        %1020 = vmatpush1.bf16.xpose.msra.mxu0 0
        %1021 = vmatprep.subr.bf16.mxu0 0
        %1022 = vmatpush1.bf16.xpose.msra.mxu0 0
        %1023 = vmatprep.subr.bf16.mxu0 0
        %1024 = vmatpush1.bf16.xpose.msra.mxu0 0
        %1025 = vmatprep.subr.bf16.mxu0 0
        %1026 = vmatpush1.bf16.xpose.msra.mxu0 0
        %1027 = vmatprep.mubr.bf16.mxu0 0
        %1028 = vmatmul.mubr.bf16.gmra.mrb[0].mxu0 %v884
        %v1029 = vpop.f32.mrb[0].mxu0
        %v1030 = vadd.f32 0.0, %v1029
        %v1031 = vpop.f32.mrb[0].mxu0
        %v1032 = vpop.f32.mrb[0].mxu0
        %v1033 = vpop.f32.mrb[0].mxu0
        %1034 = vdwg.mxu0
        %1035 = vmatprep.subr.bf16.mxu0 0
        %1036 = vmatpush1.bf16.xpose.msra.mxu0 %v959
        %1037 = vmatprep.subr.bf16.mxu0 0
        %1038 = vmatpush1.bf16.xpose.msra.mxu0 %v960
        %1039 = vmatprep.subr.bf16.mxu0 0
        %1040 = vmatpush1.bf16.xpose.msra.mxu0 %v961
        %1041 = vmatprep.subr.bf16.mxu0 0
        %1042 = vmatpush1.bf16.xpose.msra.mxu0 %v962
        %1043 = vmatprep.subr.bf16.mxu0 0
        %1044 = vmatpush1.bf16.xpose.msra.mxu0 %v963
        %1045 = vmatprep.subr.bf16.mxu0 0
        %1046 = vmatpush1.bf16.xpose.msra.mxu0 %v964
        %1047 = vmatprep.subr.bf16.mxu0 0
        %1048 = vmatpush1.bf16.xpose.msra.mxu0 %v965
        %1049 = vmatprep.subr.bf16.mxu0 0
        %1050 = vmatpush1.bf16.xpose.msra.mxu0 %v966
        %1051 = vmatprep.subr.bf16.mxu0 0
        %1052 = vmatpush1.bf16.xpose.msra.mxu0 0
        %1053 = vmatprep.subr.bf16.mxu0 0
        %1054 = vmatpush1.bf16.xpose.msra.mxu0 0
        %1055 = vmatprep.subr.bf16.mxu0 0
        %1056 = vmatpush1.bf16.xpose.msra.mxu0 0
        %1057 = vmatprep.subr.bf16.mxu0 0
        %1058 = vmatpush1.bf16.xpose.msra.mxu0 0
        %1059 = vmatprep.subr.bf16.mxu0 0
        %1060 = vmatpush1.bf16.xpose.msra.mxu0 0
        %1061 = vmatprep.subr.bf16.mxu0 0
        %1062 = vmatpush1.bf16.xpose.msra.mxu0 0
        %1063 = vmatprep.subr.bf16.mxu0 0
        %1064 = vmatpush1.bf16.xpose.msra.mxu0 0
        %1065 = vmatprep.subr.bf16.mxu0 0
        %1066 = vmatpush1.bf16.xpose.msra.mxu0 0
        %1067 = vmatprep.mubr.bf16.mxu0 0
        %1068 = vmatmul.mubr.bf16.gmra.mrb[0].mxu0 %v885
        %v1069 = vpop.f32.mrb[0].mxu0
        %v1070 = vadd.f32 0.0, %v1069
        %v1071 = vpop.f32.mrb[0].mxu0
        %v1072 = vpop.f32.mrb[0].mxu0
        %v1073 = vpop.f32.mrb[0].mxu0
        %1074 = vdwg.mxu0
        %1075 = vmax.xlane.f32.xlu0 %v1030
        %v1076 = vpop.xlane.xlu0 %1075
        %1077 = vmax.xlane.f32.xlu0 %v1070
        %v1078 = vpop.xlane.xlu0 %1077
        %v1079 = vsub.f32 %v1030, %v1076
        %v1080 = vsub.f32 %v1070, %v1078
        %v1081 = vmul.f32 %v1079, 1.442695
        %v1082 = vpow.pop %v1081
        %v1083 = vmul.f32 %v1080, 1.442695
        %v1084 = vpow.pop %v1083
        %v1085 = vpack.c.bf16 %v1082, %v1082
        %v1086 = vpack.c.bf16 %v1084, %v1084
        %v1089 = vunpack.c.l.b16 %v1085
        %v1090 = vunpack.c.l.b16 %v1086
        %v1091 = vpack.c.b16 %v1090, %v1089
        %v1109 = vunpack.c.l.b16 %v555
        %v1110 = vunpack.c.l.b16 %v556
        %v1111 = vunpack.c.l.b16 %v557
        %v1112 = vunpack.c.l.b16 %v558
        %v1113 = vunpack.c.l.b16 %v559
        %v1114 = vunpack.c.l.b16 %v560
        %v1115 = vunpack.c.l.b16 %v561
        %v1116 = vunpack.c.l.b16 %v562
        %v1117 = vunpack.c.l.b16 %v563
        %v1118 = vunpack.c.l.b16 %v564
        %v1119 = vunpack.c.l.b16 %v565
        %v1120 = vunpack.c.l.b16 %v566
        %v1121 = vunpack.c.l.b16 %v567
        %v1122 = vunpack.c.l.b16 %v568
        %v1123 = vunpack.c.l.b16 %v569
        %v1124 = vunpack.c.l.b16 %v570
        %v1125 = vpack.c.b16 %v1110, %v1109
        %v1126 = vpack.c.b16 %v1112, %v1111
        %v1127 = vpack.c.b16 %v1114, %v1113
        %v1128 = vpack.c.b16 %v1116, %v1115
        %v1129 = vpack.c.b16 %v1118, %v1117
        %v1130 = vpack.c.b16 %v1120, %v1119
        %v1131 = vpack.c.b16 %v1122, %v1121
        %v1132 = vpack.c.b16 %v1124, %v1123
        %1141 = vmatprep.subr.bf16.mxu0 0
        %1142 = vmatpush1.bf16.msra.mxu0 %v1125
        %1143 = vmatprep.subr.bf16.mxu0 0
        %1144 = vmatpush1.bf16.msra.mxu0 %v1126
        %1145 = vmatprep.subr.bf16.mxu0 0
        %1146 = vmatpush1.bf16.msra.mxu0 %v1127
        %1147 = vmatprep.subr.bf16.mxu0 0
        %1148 = vmatpush1.bf16.msra.mxu0 %v1128
        %1149 = vmatprep.subr.bf16.mxu0 0
        %1150 = vmatpush1.bf16.msra.mxu0 %v1129
        %1151 = vmatprep.subr.bf16.mxu0 0
        %1152 = vmatpush1.bf16.msra.mxu0 %v1130
        %1153 = vmatprep.subr.bf16.mxu0 0
        %1154 = vmatpush1.bf16.msra.mxu0 %v1131
        %1155 = vmatprep.subr.bf16.mxu0 0
        %1156 = vmatpush1.bf16.msra.mxu0 %v1132
        %1157 = vmatprep.subr.bf16.mxu0 0
        %1158 = vmatpush1.bf16.msra.mxu0 0
        %1159 = vmatprep.subr.bf16.mxu0 0
        %1160 = vmatpush1.bf16.msra.mxu0 0
        %1161 = vmatprep.subr.bf16.mxu0 0
        %1162 = vmatpush1.bf16.msra.mxu0 0
        %1163 = vmatprep.subr.bf16.mxu0 0
        %1164 = vmatpush1.bf16.msra.mxu0 0
        %1165 = vmatprep.subr.bf16.mxu0 0
        %1166 = vmatpush1.bf16.msra.mxu0 0
        %1167 = vmatprep.subr.bf16.mxu0 0
        %1168 = vmatpush1.bf16.msra.mxu0 0
        %1169 = vmatprep.subr.bf16.mxu0 0
        %1170 = vmatpush1.bf16.msra.mxu0 0
        %1171 = vmatprep.subr.bf16.mxu0 0
        %1172 = vmatpush1.bf16.msra.mxu0 0
        %1173 = vmatprep.mubr.bf16.mxu0 0
        %1174 = vmatmul.mubr.bf16.gmra.mrb[0].mxu0 %v1091
        %v1175 = vpop.f32.mrb[0].mxu0
        %v1176 = vadd.f32 0.0, %v1175
        %v1177 = vpop.f32.mrb[0].mxu0
        %v1178 = vpop.f32.mrb[0].mxu0
        %v1179 = vadd.f32 0.0, %v1178
        %v1180 = vpop.f32.mrb[0].mxu0
        %1181 = vdwg.mxu0
        %v1182 = vmax.f32 %v1176, 1e-30
        %v1183 = vmax.f32 %v1179, 1e-30
        %v1184 = vrcp.pop %v1182
        %v1185 = vrcp.pop %v1183
        %v1186 = vmul.f32 %v1082, %v1184
        %v1187 = vmul.f32 %v1084, %v1185
        %v1188 = vpack.c.bf16 %v1186, %v1186
        %v1189 = vpack.c.bf16 %v1187, %v1187
        %1190 = vmatprep.subr.bf16.mxu0 0
        %1191 = vmatpush1.bf16.msra.mxu0 %v979
        %1192 = vmatprep.subr.bf16.mxu0 0
        %1193 = vmatpush1.bf16.msra.mxu0 %v980
        %1194 = vmatprep.subr.bf16.mxu0 0
        %1195 = vmatpush1.bf16.msra.mxu0 %v981
        %1196 = vmatprep.subr.bf16.mxu0 0
        %1197 = vmatpush1.bf16.msra.mxu0 %v982
        %1198 = vmatprep.subr.bf16.mxu0 0
        %1199 = vmatpush1.bf16.msra.mxu0 %v983
        %1200 = vmatprep.subr.bf16.mxu0 0
        %1201 = vmatpush1.bf16.msra.mxu0 %v984
        %1202 = vmatprep.subr.bf16.mxu0 0
        %1203 = vmatpush1.bf16.msra.mxu0 %v985
        %1204 = vmatprep.subr.bf16.mxu0 0
        %1205 = vmatpush1.bf16.msra.mxu0 %v986
        %1206 = vmatprep.subr.bf16.mxu0 0
        %1207 = vmatpush1.bf16.msra.mxu0 0
        %1208 = vmatprep.subr.bf16.mxu0 0
        %1209 = vmatpush1.bf16.msra.mxu0 0
        %1210 = vmatprep.subr.bf16.mxu0 0
        %1211 = vmatpush1.bf16.msra.mxu0 0
        %1212 = vmatprep.subr.bf16.mxu0 0
        %1213 = vmatpush1.bf16.msra.mxu0 0
        %1214 = vmatprep.subr.bf16.mxu0 0
        %1215 = vmatpush1.bf16.msra.mxu0 0
        %1216 = vmatprep.subr.bf16.mxu0 0
        %1217 = vmatpush1.bf16.msra.mxu0 0
        %1218 = vmatprep.subr.bf16.mxu0 0
        %1219 = vmatpush1.bf16.msra.mxu0 0
        %1220 = vmatprep.subr.bf16.mxu0 0
        %1221 = vmatpush1.bf16.msra.mxu0 0
        %1222 = vmatprep.mubr.bf16.mxu0 0
        %1223 = vmatmul.mubr.bf16.gmra.mrb[0].mxu0 %v1188
        %v1224 = vpop.f32.mrb[0].mxu0
        %v1225 = vadd.f32 0.0, %v1224
        %v1226 = vpop.f32.mrb[0].mxu0
        %v1227 = vpop.f32.mrb[0].mxu0
        %v1228 = vpop.f32.mrb[0].mxu0
        %1229 = vdwg.mxu0
        %1230 = vmatprep.subr.bf16.mxu0 0
        %1231 = vmatpush1.bf16.msra.mxu0 %v987
        %1232 = vmatprep.subr.bf16.mxu0 0
        %1233 = vmatpush1.bf16.msra.mxu0 %v988
        %1234 = vmatprep.subr.bf16.mxu0 0
        %1235 = vmatpush1.bf16.msra.mxu0 %v989
        %1236 = vmatprep.subr.bf16.mxu0 0
        %1237 = vmatpush1.bf16.msra.mxu0 %v990
        %1238 = vmatprep.subr.bf16.mxu0 0
        %1239 = vmatpush1.bf16.msra.mxu0 %v991
        %1240 = vmatprep.subr.bf16.mxu0 0
        %1241 = vmatpush1.bf16.msra.mxu0 %v992
        %1242 = vmatprep.subr.bf16.mxu0 0
        %1243 = vmatpush1.bf16.msra.mxu0 %v993
        %1244 = vmatprep.subr.bf16.mxu0 0
        %1245 = vmatpush1.bf16.msra.mxu0 %v994
        %1246 = vmatprep.subr.bf16.mxu0 0
        %1247 = vmatpush1.bf16.msra.mxu0 0
        %1248 = vmatprep.subr.bf16.mxu0 0
        %1249 = vmatpush1.bf16.msra.mxu0 0
        %1250 = vmatprep.subr.bf16.mxu0 0
        %1251 = vmatpush1.bf16.msra.mxu0 0
        %1252 = vmatprep.subr.bf16.mxu0 0
        %1253 = vmatpush1.bf16.msra.mxu0 0
        %1254 = vmatprep.subr.bf16.mxu0 0
        %1255 = vmatpush1.bf16.msra.mxu0 0
        %1256 = vmatprep.subr.bf16.mxu0 0
        %1257 = vmatpush1.bf16.msra.mxu0 0
        %1258 = vmatprep.subr.bf16.mxu0 0
        %1259 = vmatpush1.bf16.msra.mxu0 0
        %1260 = vmatprep.subr.bf16.mxu0 0
        %1261 = vmatpush1.bf16.msra.mxu0 0
        %1262 = vmatprep.mubr.bf16.mxu0 0
        %1263 = vmatmul.mubr.bf16.gmra.mrb[0].mxu0 %v1189
        %v1264 = vpop.f32.mrb[0].mxu0
        %v1265 = vadd.f32 0.0, %v1264
        %v1266 = vpop.f32.mrb[0].mxu0
        %v1267 = vpop.f32.mrb[0].mxu0
        %v1268 = vpop.f32.mrb[0].mxu0
        %1269 = vdwg.mxu0
        %v1270 = vpack.c.bf16 %v1265, %v1225
        %v1272 = vlaneseq
        %v1273 = vshrl.u32 %v1272, 7
        %v1274 = vsub.s32 0, %v1273
        %v1275 = vrot.slane %v881, %v1274
        %v1293 = vunpack.c.l.b16 %v865
        %v1294 = vunpack.c.l.b16 %v866
        %v1295 = vunpack.c.l.b16 %v867
        %v1296 = vunpack.c.l.b16 %v868
        %v1297 = vunpack.c.l.b16 %v869
        %v1298 = vunpack.c.l.b16 %v870
        %v1299 = vunpack.c.l.b16 %v871
        %v1300 = vunpack.c.l.b16 %v872
        %v1301 = vunpack.c.l.b16 %v873
        %v1302 = vunpack.c.l.b16 %v874
        %v1303 = vunpack.c.l.b16 %v875
        %v1304 = vunpack.c.l.b16 %v876
        %v1305 = vunpack.c.l.b16 %v877
        %v1306 = vunpack.c.l.b16 %v878
        %v1307 = vunpack.c.l.b16 %v879
        %v1308 = vunpack.c.l.b16 %v880
        %v1309 = vpack.c.b16 %v1294, %v1293
        %v1310 = vpack.c.b16 %v1296, %v1295
        %v1311 = vpack.c.b16 %v1298, %v1297
        %v1312 = vpack.c.b16 %v1300, %v1299
        %v1313 = vpack.c.b16 %v1302, %v1301
        %v1314 = vpack.c.b16 %v1304, %v1303
        %v1315 = vpack.c.b16 %v1306, %v1305
        %v1316 = vpack.c.b16 %v1308, %v1307
        %1325 = vmatprep.subr.bf16.mxu0 0
        %1326 = vmatpush1.bf16.msra.mxu0 %v1309
        %1327 = vmatprep.subr.bf16.mxu0 0
        %1328 = vmatpush1.bf16.msra.mxu0 %v1310
        %1329 = vmatprep.subr.bf16.mxu0 0
        %1330 = vmatpush1.bf16.msra.mxu0 %v1311
        %1331 = vmatprep.subr.bf16.mxu0 0
        %1332 = vmatpush1.bf16.msra.mxu0 %v1312
        %1333 = vmatprep.subr.bf16.mxu0 0
        %1334 = vmatpush1.bf16.msra.mxu0 %v1313
        %1335 = vmatprep.subr.bf16.mxu0 0
        %1336 = vmatpush1.bf16.msra.mxu0 %v1314
        %1337 = vmatprep.subr.bf16.mxu0 0
        %1338 = vmatpush1.bf16.msra.mxu0 %v1315
        %1339 = vmatprep.subr.bf16.mxu0 0
        %1340 = vmatpush1.bf16.msra.mxu0 %v1316
        %1341 = vmatprep.subr.bf16.mxu0 0
        %1342 = vmatpush1.bf16.msra.mxu0 0
        %1343 = vmatprep.subr.bf16.mxu0 0
        %1344 = vmatpush1.bf16.msra.mxu0 0
        %1345 = vmatprep.subr.bf16.mxu0 0
        %1346 = vmatpush1.bf16.msra.mxu0 0
        %1347 = vmatprep.subr.bf16.mxu0 0
        %1348 = vmatpush1.bf16.msra.mxu0 0
        %1349 = vmatprep.subr.bf16.mxu0 0
        %1350 = vmatpush1.bf16.msra.mxu0 0
        %1351 = vmatprep.subr.bf16.mxu0 0
        %1352 = vmatpush1.bf16.msra.mxu0 0
        %1353 = vmatprep.subr.bf16.mxu0 0
        %1354 = vmatpush1.bf16.msra.mxu0 0
        %1355 = vmatprep.subr.bf16.mxu0 0
        %1356 = vmatpush1.bf16.msra.mxu0 0
        %1357 = vmatprep.mubr.bf16.mxu0 0
        %1358 = vmatmul.mubr.bf16.gmra.mrb[0].mxu0 %v1270
        %v1359 = vpop.f32.mrb[0].mxu0
        %v1360 = vadd.f32 %v1275, %v1359
        %v1361 = vpop.f32.mrb[0].mxu0
        %v1362 = vpop.f32.mrb[0].mxu0
        %v1363 = vadd.f32 %v1275, %v1362
        %v1364 = vpop.f32.mrb[0].mxu0
        %1365 = vdwg.mxu0
        %v1366 = vadd.f32 %v533, %v1360
        %v1367 = vadd.f32 %v534, %v1363
        %v1368 = vld [vmem:[%s470 + $0x4] sm:$0x1]
        %v1369 = vld [vmem:[%s470 + $0x5] sm:$0x1]
        %1370 = vadd.xlane.f32.xlu0 %v1366
        %v1371 = vpop.xlane.xlu0 %1370
        %1372 = vadd.xlane.f32.xlu0 %v1367
        %v1373 = vpop.xlane.xlu0 %1372
        %v1374 = vrcp.pop 128.0
        %v1375 = vmul.f32 %v1371, %v1374
        %v1376 = vmul.f32 %v1373, %v1374
        %v1377 = vsub.f32 %v1366, %v1375
        %v1378 = vsub.f32 %v1367, %v1376
        %v1379 = vmul.f32 %v1377, %v1377
        %v1380 = vmul.f32 %v1378, %v1378
        %1381 = vadd.xlane.f32.xlu0 %v1379
        %v1382 = vpop.xlane.xlu0 %1381
        %1383 = vadd.xlane.f32.xlu0 %v1380
        %v1384 = vpop.xlane.xlu0 %1383
        %v1385 = vmul.f32 %v1382, %v1374
        %v1386 = vmul.f32 %v1384, %v1374
        %v1387 = vadd.f32 %v1385, 1e-06
        %v1388 = vadd.f32 %v1386, 1e-06
        %v1389 = vrsqrt.pop %v1387
        %v1390 = vrsqrt.pop %v1388
        %v1391 = vmul.f32 %v1377, %v1389
        %v1392 = vmul.f32 %v1378, %v1390
        %v1394 = vlaneseq
        %v1395 = vshrl.u32 %v1394, 7
        %v1396 = vsub.s32 0, %v1395
        %v1397 = vrot.slane %v1368, %v1396
        %v1399 = vmul.f32 %v1391, %v1397
        %v1400 = vmul.f32 %v1392, %v1397
        %v1402 = vlaneseq
        %v1403 = vshrl.u32 %v1402, 7
        %v1404 = vsub.s32 0, %v1403
        %v1405 = vrot.slane %v1369, %v1404
        %v1407 = vadd.f32 %v1399, %v1405
        %v1408 = vadd.f32 %v1400, %v1405
        %v1409 = vld [vmem:[%s452 + $0x10] sm:$0xf]
        %v1410 = vld [vmem:[%s452 + $0x30] sm:$0xf]
        %v1411 = vld [vmem:[%s452 + $0x50] sm:$0xf]
        %v1412 = vld [vmem:[%s452 + $0x70] sm:$0xf]
        %v1413 = vld [vmem:[%s452 + $0x90] sm:$0xf]
        %v1414 = vld [vmem:[%s452 + $0xb0] sm:$0xf]
        %v1415 = vld [vmem:[%s452 + $0xd0] sm:$0xf]
        %v1416 = vld [vmem:[%s452 + $0xf0] sm:$0xf]
        %v1417 = vld [vmem:[%s452 + $0x110] sm:$0xf]
        %v1418 = vld [vmem:[%s452 + $0x130] sm:$0xf]
        %v1419 = vld [vmem:[%s452 + $0x150] sm:$0xf]
        %v1420 = vld [vmem:[%s452 + $0x170] sm:$0xf]
        %v1421 = vld [vmem:[%s452 + $0x190] sm:$0xf]
        %v1422 = vld [vmem:[%s452 + $0x1b0] sm:$0xf]
        %v1423 = vld [vmem:[%s452 + $0x1d0] sm:$0xf]
        %v1424 = vld [vmem:[%s452 + $0x1f0] sm:$0xf]
        %v1425 = vpack.c.bf16 %v1408, %v1407
        %v1426 = vld [vmem:[%s470 + $0x6] sm:$0x1]
        %v1428 = vlaneseq
        %v1429 = vshrl.u32 %v1428, 7
        %v1430 = vsub.s32 0, %v1429
        %v1431 = vrot.slane %v1426, %v1430
        %v1449 = vunpack.c.l.b16 %v1409
        %v1450 = vunpack.c.l.b16 %v1410
        %v1451 = vunpack.c.l.b16 %v1411
        %v1452 = vunpack.c.l.b16 %v1412
        %v1453 = vunpack.c.l.b16 %v1413
        %v1454 = vunpack.c.l.b16 %v1414
        %v1455 = vunpack.c.l.b16 %v1415
        %v1456 = vunpack.c.l.b16 %v1416
        %v1457 = vunpack.c.l.b16 %v1417
        %v1458 = vunpack.c.l.b16 %v1418
        %v1459 = vunpack.c.l.b16 %v1419
        %v1460 = vunpack.c.l.b16 %v1420
        %v1461 = vunpack.c.l.b16 %v1421
        %v1462 = vunpack.c.l.b16 %v1422
        %v1463 = vunpack.c.l.b16 %v1423
        %v1464 = vunpack.c.l.b16 %v1424
        %v1465 = vpack.c.b16 %v1450, %v1449
        %v1466 = vpack.c.b16 %v1452, %v1451
        %v1467 = vpack.c.b16 %v1454, %v1453
        %v1468 = vpack.c.b16 %v1456, %v1455
        %v1469 = vpack.c.b16 %v1458, %v1457
        %v1470 = vpack.c.b16 %v1460, %v1459
        %v1471 = vpack.c.b16 %v1462, %v1461
        %v1472 = vpack.c.b16 %v1464, %v1463
        %1481 = vmatprep.subr.bf16.mxu0 0
        %1482 = vmatpush1.bf16.msra.mxu0 %v1465
        %1483 = vmatprep.subr.bf16.mxu0 0
        %1484 = vmatpush1.bf16.msra.mxu0 %v1466
        %1485 = vmatprep.subr.bf16.mxu0 0
        %1486 = vmatpush1.bf16.msra.mxu0 %v1467
        %1487 = vmatprep.subr.bf16.mxu0 0
        %1488 = vmatpush1.bf16.msra.mxu0 %v1468
        %1489 = vmatprep.subr.bf16.mxu0 0
        %1490 = vmatpush1.bf16.msra.mxu0 %v1469
        %1491 = vmatprep.subr.bf16.mxu0 0
        %1492 = vmatpush1.bf16.msra.mxu0 %v1470
        %1493 = vmatprep.subr.bf16.mxu0 0
        %1494 = vmatpush1.bf16.msra.mxu0 %v1471
        %1495 = vmatprep.subr.bf16.mxu0 0
        %1496 = vmatpush1.bf16.msra.mxu0 %v1472
        %1497 = vmatprep.subr.bf16.mxu0 0
        %1498 = vmatpush1.bf16.msra.mxu0 0
        %1499 = vmatprep.subr.bf16.mxu0 0
        %1500 = vmatpush1.bf16.msra.mxu0 0
        %1501 = vmatprep.subr.bf16.mxu0 0
        %1502 = vmatpush1.bf16.msra.mxu0 0
        %1503 = vmatprep.subr.bf16.mxu0 0
        %1504 = vmatpush1.bf16.msra.mxu0 0
        %1505 = vmatprep.subr.bf16.mxu0 0
        %1506 = vmatpush1.bf16.msra.mxu0 0
        %1507 = vmatprep.subr.bf16.mxu0 0
        %1508 = vmatpush1.bf16.msra.mxu0 0
        %1509 = vmatprep.subr.bf16.mxu0 0
        %1510 = vmatpush1.bf16.msra.mxu0 0
        %1511 = vmatprep.subr.bf16.mxu0 0
        %1512 = vmatpush1.bf16.msra.mxu0 0
        %1513 = vmatprep.mubr.bf16.mxu0 0
        %1514 = vmatmul.mubr.bf16.gmra.mrb[0].mxu0 %v1425
        %v1515 = vpop.f32.mrb[0].mxu0
        %v1516 = vadd.f32 %v1431, %v1515
        %v1517 = vpop.f32.mrb[0].mxu0
        %v1518 = vpop.f32.mrb[0].mxu0
        %v1519 = vadd.f32 %v1431, %v1518
        %v1520 = vpop.f32.mrb[0].mxu0
        %1521 = vdwg.mxu0
        %v1522 = vld [vmem:[%s452 + $0x14] sm:$0xf]
        %v1523 = vld [vmem:[%s452 + $0x34] sm:$0xf]
        %v1524 = vld [vmem:[%s452 + $0x54] sm:$0xf]
        %v1525 = vld [vmem:[%s452 + $0x74] sm:$0xf]
        %v1526 = vld [vmem:[%s452 + $0x94] sm:$0xf]
        %v1527 = vld [vmem:[%s452 + $0xb4] sm:$0xf]
        %v1528 = vld [vmem:[%s452 + $0xd4] sm:$0xf]
        %v1529 = vld [vmem:[%s452 + $0xf4] sm:$0xf]
        %v1530 = vld [vmem:[%s452 + $0x114] sm:$0xf]
        %v1531 = vld [vmem:[%s452 + $0x134] sm:$0xf]
        %v1532 = vld [vmem:[%s452 + $0x154] sm:$0xf]
        %v1533 = vld [vmem:[%s452 + $0x174] sm:$0xf]
        %v1534 = vld [vmem:[%s452 + $0x194] sm:$0xf]
        %v1535 = vld [vmem:[%s452 + $0x1b4] sm:$0xf]
        %v1536 = vld [vmem:[%s452 + $0x1d4] sm:$0xf]
        %v1537 = vld [vmem:[%s452 + $0x1f4] sm:$0xf]
        %v1538 = vld [vmem:[%s470 + $0x7] sm:$0x1]
        %v1539 = vmul.f32 %v1516, 0.25
        %v1540 = vmul.f32 %v1519, 0.25
        %v1541 = vpack.c.bf16 %v1539, %v1539
        %v1542 = vpack.c.bf16 %v1540, %v1540
        %v1547 = vrot.slane %v535, 4
        %v1548 = vrot.slane %v536, 4
        %v1549 = vrot.slane %v537, 4
        %v1550 = vrot.slane %v538, 4
        %v1551 = vunpack.c.l.b16 %v535
        %v1552 = vunpack.c.l.b16 %v536
        %v1553 = vunpack.c.l.b16 %v537
        %v1554 = vunpack.c.l.b16 %v538
        %v1555 = vpack.c.b16 %v1552, %v1551
        %v1556 = vpack.c.b16 %v1554, %v1553
        %v1575 = vunpack.c.l.b16 %v571
        %v1576 = vunpack.c.l.b16 %v572
        %v1577 = vunpack.c.l.b16 %v573
        %v1578 = vunpack.c.l.b16 %v574
        %v1579 = vunpack.c.l.b16 %v575
        %v1580 = vunpack.c.l.b16 %v576
        %v1581 = vunpack.c.l.b16 %v577
        %v1582 = vunpack.c.l.b16 %v578
        %v1583 = vunpack.c.l.b16 %v579
        %v1584 = vunpack.c.l.b16 %v580
        %v1585 = vunpack.c.l.b16 %v581
        %v1586 = vunpack.c.l.b16 %v582
        %v1587 = vunpack.c.l.b16 %v583
        %v1588 = vunpack.c.l.b16 %v584
        %v1589 = vunpack.c.l.b16 %v585
        %v1590 = vunpack.c.l.b16 %v586
        %v1591 = vpack.c.b16 %v1576, %v1575
        %v1592 = vpack.c.b16 %v1578, %v1577
        %v1593 = vpack.c.b16 %v1580, %v1579
        %v1594 = vpack.c.b16 %v1582, %v1581
        %v1595 = vpack.c.b16 %v1584, %v1583
        %v1596 = vpack.c.b16 %v1586, %v1585
        %v1597 = vpack.c.b16 %v1588, %v1587
        %v1598 = vpack.c.b16 %v1590, %v1589
        %v1607 = vmul.bf16 %v1555, %v1591
        %v1608 = vmul.bf16 %v1555, %v1592
        %v1609 = vmul.bf16 %v1555, %v1593
        %v1610 = vmul.bf16 %v1555, %v1594
        %v1611 = vmul.bf16 %v1555, %v1595
        %v1612 = vmul.bf16 %v1555, %v1596
        %v1613 = vmul.bf16 %v1555, %v1597
        %v1614 = vmul.bf16 %v1555, %v1598
        %v1615 = vmul.bf16 %v1556, %v1591
        %v1616 = vmul.bf16 %v1556, %v1592
        %v1617 = vmul.bf16 %v1556, %v1593
        %v1618 = vmul.bf16 %v1556, %v1594
        %v1619 = vmul.bf16 %v1556, %v1595
        %v1620 = vmul.bf16 %v1556, %v1596
        %v1621 = vmul.bf16 %v1556, %v1597
        %v1622 = vmul.bf16 %v1556, %v1598
        %v1623 = vunpack.c.l.b16 %v1547
        %v1624 = vunpack.c.l.b16 %v1548
        %v1625 = vunpack.c.l.b16 %v1549
        %v1626 = vunpack.c.l.b16 %v1550
        %v1627 = vpack.c.b16 %v1624, %v1623
        %v1628 = vpack.c.b16 %v1626, %v1625
        %v1631 = vmul.bf16 %v1627, %v1591
        %v1632 = vmul.bf16 %v1627, %v1592
        %v1633 = vmul.bf16 %v1627, %v1593
        %v1634 = vmul.bf16 %v1627, %v1594
        %v1635 = vmul.bf16 %v1627, %v1595
        %v1636 = vmul.bf16 %v1627, %v1596
        %v1637 = vmul.bf16 %v1627, %v1597
        %v1638 = vmul.bf16 %v1627, %v1598
        %v1639 = vmul.bf16 %v1628, %v1591
        %v1640 = vmul.bf16 %v1628, %v1592
        %v1641 = vmul.bf16 %v1628, %v1593
        %v1642 = vmul.bf16 %v1628, %v1594
        %v1643 = vmul.bf16 %v1628, %v1595
        %v1644 = vmul.bf16 %v1628, %v1596
        %v1645 = vmul.bf16 %v1628, %v1597
        %v1646 = vmul.bf16 %v1628, %v1598
        %1647 = vmatprep.subr.bf16.mxu0 0
        %1648 = vmatpush1.bf16.xpose.msra.mxu0 %v1607
        %1649 = vmatprep.subr.bf16.mxu0 0
        %1650 = vmatpush1.bf16.xpose.msra.mxu0 %v1608
        %1651 = vmatprep.subr.bf16.mxu0 0
        %1652 = vmatpush1.bf16.xpose.msra.mxu0 %v1609
        %1653 = vmatprep.subr.bf16.mxu0 0
        %1654 = vmatpush1.bf16.xpose.msra.mxu0 %v1610
        %1655 = vmatprep.subr.bf16.mxu0 0
        %1656 = vmatpush1.bf16.xpose.msra.mxu0 %v1611
        %1657 = vmatprep.subr.bf16.mxu0 0
        %1658 = vmatpush1.bf16.xpose.msra.mxu0 %v1612
        %1659 = vmatprep.subr.bf16.mxu0 0
        %1660 = vmatpush1.bf16.xpose.msra.mxu0 %v1613
        %1661 = vmatprep.subr.bf16.mxu0 0
        %1662 = vmatpush1.bf16.xpose.msra.mxu0 %v1614
        %1663 = vmatprep.subr.bf16.mxu0 0
        %1664 = vmatpush1.bf16.xpose.msra.mxu0 0
        %1665 = vmatprep.subr.bf16.mxu0 0
        %1666 = vmatpush1.bf16.xpose.msra.mxu0 0
        %1667 = vmatprep.subr.bf16.mxu0 0
        %1668 = vmatpush1.bf16.xpose.msra.mxu0 0
        %1669 = vmatprep.subr.bf16.mxu0 0
        %1670 = vmatpush1.bf16.xpose.msra.mxu0 0
        %1671 = vmatprep.subr.bf16.mxu0 0
        %1672 = vmatpush1.bf16.xpose.msra.mxu0 0
        %1673 = vmatprep.subr.bf16.mxu0 0
        %1674 = vmatpush1.bf16.xpose.msra.mxu0 0
        %1675 = vmatprep.subr.bf16.mxu0 0
        %1676 = vmatpush1.bf16.xpose.msra.mxu0 0
        %1677 = vmatprep.subr.bf16.mxu0 0
        %1678 = vmatpush1.bf16.xpose.msra.mxu0 0
        %1679 = vmatprep.mubr.bf16.mxu0 0
        %1680 = vmatmul.mubr.bf16.gmra.mrb[0].mxu0 %v1541
        %v1681 = vpop.f32.mrb[0].mxu0
        %v1682 = vadd.f32 0.0, %v1681
        %v1683 = vpop.f32.mrb[0].mxu0
        %v1684 = vpop.f32.mrb[0].mxu0
        %v1685 = vpop.f32.mrb[0].mxu0
        %1686 = vdwg.mxu0
        %1687 = vmatprep.subr.bf16.mxu0 0
        %1688 = vmatpush1.bf16.xpose.msra.mxu0 %v1615
        %1689 = vmatprep.subr.bf16.mxu0 0
        %1690 = vmatpush1.bf16.xpose.msra.mxu0 %v1616
        %1691 = vmatprep.subr.bf16.mxu0 0
        %1692 = vmatpush1.bf16.xpose.msra.mxu0 %v1617
        %1693 = vmatprep.subr.bf16.mxu0 0
        %1694 = vmatpush1.bf16.xpose.msra.mxu0 %v1618
        %1695 = vmatprep.subr.bf16.mxu0 0
        %1696 = vmatpush1.bf16.xpose.msra.mxu0 %v1619
        %1697 = vmatprep.subr.bf16.mxu0 0
        %1698 = vmatpush1.bf16.xpose.msra.mxu0 %v1620
        %1699 = vmatprep.subr.bf16.mxu0 0
        %1700 = vmatpush1.bf16.xpose.msra.mxu0 %v1621
        %1701 = vmatprep.subr.bf16.mxu0 0
        %1702 = vmatpush1.bf16.xpose.msra.mxu0 %v1622
        %1703 = vmatprep.subr.bf16.mxu0 0
        %1704 = vmatpush1.bf16.xpose.msra.mxu0 0
        %1705 = vmatprep.subr.bf16.mxu0 0
        %1706 = vmatpush1.bf16.xpose.msra.mxu0 0
        %1707 = vmatprep.subr.bf16.mxu0 0
        %1708 = vmatpush1.bf16.xpose.msra.mxu0 0
        %1709 = vmatprep.subr.bf16.mxu0 0
        %1710 = vmatpush1.bf16.xpose.msra.mxu0 0
        %1711 = vmatprep.subr.bf16.mxu0 0
        %1712 = vmatpush1.bf16.xpose.msra.mxu0 0
        %1713 = vmatprep.subr.bf16.mxu0 0
        %1714 = vmatpush1.bf16.xpose.msra.mxu0 0
        %1715 = vmatprep.subr.bf16.mxu0 0
        %1716 = vmatpush1.bf16.xpose.msra.mxu0 0
        %1717 = vmatprep.subr.bf16.mxu0 0
        %1718 = vmatpush1.bf16.xpose.msra.mxu0 0
        %1719 = vmatprep.mubr.bf16.mxu0 0
        %1720 = vmatmul.mubr.bf16.gmra.mrb[0].mxu0 %v1542
        %v1721 = vpop.f32.mrb[0].mxu0
        %v1722 = vadd.f32 0.0, %v1721
        %v1723 = vpop.f32.mrb[0].mxu0
        %v1724 = vpop.f32.mrb[0].mxu0
        %v1725 = vpop.f32.mrb[0].mxu0
        %1726 = vdwg.mxu0
        %1727 = vmax.xlane.f32.xlu0 %v1682
        %v1728 = vpop.xlane.xlu0 %1727
        %1729 = vmax.xlane.f32.xlu0 %v1722
        %v1730 = vpop.xlane.xlu0 %1729
        %v1731 = vsub.f32 %v1682, %v1728
        %v1732 = vsub.f32 %v1722, %v1730
        %v1733 = vmul.f32 %v1731, 1.442695
        %v1734 = vpow.pop %v1733
        %v1735 = vmul.f32 %v1732, 1.442695
        %v1736 = vpow.pop %v1735
        %v1737 = vpack.c.bf16 %v1734, %v1734
        %v1738 = vpack.c.bf16 %v1736, %v1736
        %v1741 = vunpack.c.l.b16 %v1737
        %v1742 = vunpack.c.l.b16 %v1738
        %v1743 = vpack.c.b16 %v1742, %v1741
        %v1761 = vunpack.c.l.b16 %v587
        %v1762 = vunpack.c.l.b16 %v588
        %v1763 = vunpack.c.l.b16 %v589
        %v1764 = vunpack.c.l.b16 %v590
        %v1765 = vunpack.c.l.b16 %v591
        %v1766 = vunpack.c.l.b16 %v592
        %v1767 = vunpack.c.l.b16 %v593
        %v1768 = vunpack.c.l.b16 %v594
        %v1769 = vunpack.c.l.b16 %v595
        %v1770 = vunpack.c.l.b16 %v596
        %v1771 = vunpack.c.l.b16 %v597
        %v1772 = vunpack.c.l.b16 %v598
        %v1773 = vunpack.c.l.b16 %v599
        %v1774 = vunpack.c.l.b16 %v600
        %v1775 = vunpack.c.l.b16 %v601
        %v1776 = vunpack.c.l.b16 %v602
        %v1777 = vpack.c.b16 %v1762, %v1761
        %v1778 = vpack.c.b16 %v1764, %v1763
        %v1779 = vpack.c.b16 %v1766, %v1765
        %v1780 = vpack.c.b16 %v1768, %v1767
        %v1781 = vpack.c.b16 %v1770, %v1769
        %v1782 = vpack.c.b16 %v1772, %v1771
        %v1783 = vpack.c.b16 %v1774, %v1773
        %v1784 = vpack.c.b16 %v1776, %v1775
        %1793 = vmatprep.subr.bf16.mxu0 0
        %1794 = vmatpush1.bf16.msra.mxu0 %v1777
        %1795 = vmatprep.subr.bf16.mxu0 0
        %1796 = vmatpush1.bf16.msra.mxu0 %v1778
        %1797 = vmatprep.subr.bf16.mxu0 0
        %1798 = vmatpush1.bf16.msra.mxu0 %v1779
        %1799 = vmatprep.subr.bf16.mxu0 0
        %1800 = vmatpush1.bf16.msra.mxu0 %v1780
        %1801 = vmatprep.subr.bf16.mxu0 0
        %1802 = vmatpush1.bf16.msra.mxu0 %v1781
        %1803 = vmatprep.subr.bf16.mxu0 0
        %1804 = vmatpush1.bf16.msra.mxu0 %v1782
        %1805 = vmatprep.subr.bf16.mxu0 0
        %1806 = vmatpush1.bf16.msra.mxu0 %v1783
        %1807 = vmatprep.subr.bf16.mxu0 0
        %1808 = vmatpush1.bf16.msra.mxu0 %v1784
        %1809 = vmatprep.subr.bf16.mxu0 0
        %1810 = vmatpush1.bf16.msra.mxu0 0
        %1811 = vmatprep.subr.bf16.mxu0 0
        %1812 = vmatpush1.bf16.msra.mxu0 0
        %1813 = vmatprep.subr.bf16.mxu0 0
        %1814 = vmatpush1.bf16.msra.mxu0 0
        %1815 = vmatprep.subr.bf16.mxu0 0
        %1816 = vmatpush1.bf16.msra.mxu0 0
        %1817 = vmatprep.subr.bf16.mxu0 0
        %1818 = vmatpush1.bf16.msra.mxu0 0
        %1819 = vmatprep.subr.bf16.mxu0 0
        %1820 = vmatpush1.bf16.msra.mxu0 0
        %1821 = vmatprep.subr.bf16.mxu0 0
        %1822 = vmatpush1.bf16.msra.mxu0 0
        %1823 = vmatprep.subr.bf16.mxu0 0
        %1824 = vmatpush1.bf16.msra.mxu0 0
        %1825 = vmatprep.mubr.bf16.mxu0 0
        %1826 = vmatmul.mubr.bf16.gmra.mrb[0].mxu0 %v1743
        %v1827 = vpop.f32.mrb[0].mxu0
        %v1828 = vadd.f32 0.0, %v1827
        %v1829 = vpop.f32.mrb[0].mxu0
        %v1830 = vpop.f32.mrb[0].mxu0
        %v1831 = vadd.f32 0.0, %v1830
        %v1832 = vpop.f32.mrb[0].mxu0
        %1833 = vdwg.mxu0
        %v1834 = vmax.f32 %v1828, 1e-30
        %v1835 = vmax.f32 %v1831, 1e-30
        %v1836 = vrcp.pop %v1834
        %v1837 = vrcp.pop %v1835
        %v1838 = vmul.f32 %v1734, %v1836
        %v1839 = vmul.f32 %v1736, %v1837
        %v1840 = vpack.c.bf16 %v1838, %v1838
        %v1841 = vpack.c.bf16 %v1839, %v1839
        %1842 = vmatprep.subr.bf16.mxu0 0
        %1843 = vmatpush1.bf16.msra.mxu0 %v1631
        %1844 = vmatprep.subr.bf16.mxu0 0
        %1845 = vmatpush1.bf16.msra.mxu0 %v1632
        %1846 = vmatprep.subr.bf16.mxu0 0
        %1847 = vmatpush1.bf16.msra.mxu0 %v1633
        %1848 = vmatprep.subr.bf16.mxu0 0
        %1849 = vmatpush1.bf16.msra.mxu0 %v1634
        %1850 = vmatprep.subr.bf16.mxu0 0
        %1851 = vmatpush1.bf16.msra.mxu0 %v1635
        %1852 = vmatprep.subr.bf16.mxu0 0
        %1853 = vmatpush1.bf16.msra.mxu0 %v1636
        %1854 = vmatprep.subr.bf16.mxu0 0
        %1855 = vmatpush1.bf16.msra.mxu0 %v1637
        %1856 = vmatprep.subr.bf16.mxu0 0
        %1857 = vmatpush1.bf16.msra.mxu0 %v1638
        %1858 = vmatprep.subr.bf16.mxu0 0
        %1859 = vmatpush1.bf16.msra.mxu0 0
        %1860 = vmatprep.subr.bf16.mxu0 0
        %1861 = vmatpush1.bf16.msra.mxu0 0
        %1862 = vmatprep.subr.bf16.mxu0 0
        %1863 = vmatpush1.bf16.msra.mxu0 0
        %1864 = vmatprep.subr.bf16.mxu0 0
        %1865 = vmatpush1.bf16.msra.mxu0 0
        %1866 = vmatprep.subr.bf16.mxu0 0
        %1867 = vmatpush1.bf16.msra.mxu0 0
        %1868 = vmatprep.subr.bf16.mxu0 0
        %1869 = vmatpush1.bf16.msra.mxu0 0
        %1870 = vmatprep.subr.bf16.mxu0 0
        %1871 = vmatpush1.bf16.msra.mxu0 0
        %1872 = vmatprep.subr.bf16.mxu0 0
        %1873 = vmatpush1.bf16.msra.mxu0 0
        %1874 = vmatprep.mubr.bf16.mxu0 0
        %1875 = vmatmul.mubr.bf16.gmra.mrb[0].mxu0 %v1840
        %v1876 = vpop.f32.mrb[0].mxu0
        %v1877 = vadd.f32 0.0, %v1876
        %v1878 = vpop.f32.mrb[0].mxu0
        %v1879 = vpop.f32.mrb[0].mxu0
        %v1880 = vpop.f32.mrb[0].mxu0
        %1881 = vdwg.mxu0
        %1882 = vmatprep.subr.bf16.mxu0 0
        %1883 = vmatpush1.bf16.msra.mxu0 %v1639
        %1884 = vmatprep.subr.bf16.mxu0 0
        %1885 = vmatpush1.bf16.msra.mxu0 %v1640
        %1886 = vmatprep.subr.bf16.mxu0 0
        %1887 = vmatpush1.bf16.msra.mxu0 %v1641
        %1888 = vmatprep.subr.bf16.mxu0 0
        %1889 = vmatpush1.bf16.msra.mxu0 %v1642
        %1890 = vmatprep.subr.bf16.mxu0 0
        %1891 = vmatpush1.bf16.msra.mxu0 %v1643
        %1892 = vmatprep.subr.bf16.mxu0 0
        %1893 = vmatpush1.bf16.msra.mxu0 %v1644
        %1894 = vmatprep.subr.bf16.mxu0 0
        %1895 = vmatpush1.bf16.msra.mxu0 %v1645
        %1896 = vmatprep.subr.bf16.mxu0 0
        %1897 = vmatpush1.bf16.msra.mxu0 %v1646
        %1898 = vmatprep.subr.bf16.mxu0 0
        %1899 = vmatpush1.bf16.msra.mxu0 0
        %1900 = vmatprep.subr.bf16.mxu0 0
        %1901 = vmatpush1.bf16.msra.mxu0 0
        %1902 = vmatprep.subr.bf16.mxu0 0
        %1903 = vmatpush1.bf16.msra.mxu0 0
        %1904 = vmatprep.subr.bf16.mxu0 0
        %1905 = vmatpush1.bf16.msra.mxu0 0
        %1906 = vmatprep.subr.bf16.mxu0 0
        %1907 = vmatpush1.bf16.msra.mxu0 0
        %1908 = vmatprep.subr.bf16.mxu0 0
        %1909 = vmatpush1.bf16.msra.mxu0 0
        %1910 = vmatprep.subr.bf16.mxu0 0
        %1911 = vmatpush1.bf16.msra.mxu0 0
        %1912 = vmatprep.subr.bf16.mxu0 0
        %1913 = vmatpush1.bf16.msra.mxu0 0
        %1914 = vmatprep.mubr.bf16.mxu0 0
        %1915 = vmatmul.mubr.bf16.gmra.mrb[0].mxu0 %v1841
        %v1916 = vpop.f32.mrb[0].mxu0
        %v1917 = vadd.f32 0.0, %v1916
        %v1918 = vpop.f32.mrb[0].mxu0
        %v1919 = vpop.f32.mrb[0].mxu0
        %v1920 = vpop.f32.mrb[0].mxu0
        %1921 = vdwg.mxu0
        %v1922 = vpack.c.bf16 %v1917, %v1877
        %v1924 = vlaneseq
        %v1925 = vshrl.u32 %v1924, 7
        %v1926 = vsub.s32 0, %v1925
        %v1927 = vrot.slane %v1538, %v1926
        %v1945 = vunpack.c.l.b16 %v1522
        %v1946 = vunpack.c.l.b16 %v1523
        %v1947 = vunpack.c.l.b16 %v1524
        %v1948 = vunpack.c.l.b16 %v1525
        %v1949 = vunpack.c.l.b16 %v1526
        %v1950 = vunpack.c.l.b16 %v1527
        %v1951 = vunpack.c.l.b16 %v1528
        %v1952 = vunpack.c.l.b16 %v1529
        %v1953 = vunpack.c.l.b16 %v1530
        %v1954 = vunpack.c.l.b16 %v1531
        %v1955 = vunpack.c.l.b16 %v1532
        %v1956 = vunpack.c.l.b16 %v1533
        %v1957 = vunpack.c.l.b16 %v1534
        %v1958 = vunpack.c.l.b16 %v1535
        %v1959 = vunpack.c.l.b16 %v1536
        %v1960 = vunpack.c.l.b16 %v1537
        %v1961 = vpack.c.b16 %v1946, %v1945
        %v1962 = vpack.c.b16 %v1948, %v1947
        %v1963 = vpack.c.b16 %v1950, %v1949
        %v1964 = vpack.c.b16 %v1952, %v1951
        %v1965 = vpack.c.b16 %v1954, %v1953
        %v1966 = vpack.c.b16 %v1956, %v1955
        %v1967 = vpack.c.b16 %v1958, %v1957
        %v1968 = vpack.c.b16 %v1960, %v1959
        %1977 = vmatprep.subr.bf16.mxu0 0
        %1978 = vmatpush1.bf16.msra.mxu0 %v1961
        %1979 = vmatprep.subr.bf16.mxu0 0
        %1980 = vmatpush1.bf16.msra.mxu0 %v1962
        %1981 = vmatprep.subr.bf16.mxu0 0
        %1982 = vmatpush1.bf16.msra.mxu0 %v1963
        %1983 = vmatprep.subr.bf16.mxu0 0
        %1984 = vmatpush1.bf16.msra.mxu0 %v1964
        %1985 = vmatprep.subr.bf16.mxu0 0
        %1986 = vmatpush1.bf16.msra.mxu0 %v1965
        %1987 = vmatprep.subr.bf16.mxu0 0
        %1988 = vmatpush1.bf16.msra.mxu0 %v1966
        %1989 = vmatprep.subr.bf16.mxu0 0
        %1990 = vmatpush1.bf16.msra.mxu0 %v1967
        %1991 = vmatprep.subr.bf16.mxu0 0
        %1992 = vmatpush1.bf16.msra.mxu0 %v1968
        %1993 = vmatprep.subr.bf16.mxu0 0
        %1994 = vmatpush1.bf16.msra.mxu0 0
        %1995 = vmatprep.subr.bf16.mxu0 0
        %1996 = vmatpush1.bf16.msra.mxu0 0
        %1997 = vmatprep.subr.bf16.mxu0 0
        %1998 = vmatpush1.bf16.msra.mxu0 0
        %1999 = vmatprep.subr.bf16.mxu0 0
        %2000 = vmatpush1.bf16.msra.mxu0 0
        %2001 = vmatprep.subr.bf16.mxu0 0
        %2002 = vmatpush1.bf16.msra.mxu0 0
        %2003 = vmatprep.subr.bf16.mxu0 0
        %2004 = vmatpush1.bf16.msra.mxu0 0
        %2005 = vmatprep.subr.bf16.mxu0 0
        %2006 = vmatpush1.bf16.msra.mxu0 0
        %2007 = vmatprep.subr.bf16.mxu0 0
        %2008 = vmatpush1.bf16.msra.mxu0 0
        %2009 = vmatprep.mubr.bf16.mxu0 0
        %2010 = vmatmul.mubr.bf16.gmra.mrb[0].mxu0 %v1922
        %v2011 = vpop.f32.mrb[0].mxu0
        %v2012 = vadd.f32 %v1927, %v2011
        %v2013 = vpop.f32.mrb[0].mxu0
        %v2014 = vpop.f32.mrb[0].mxu0
        %v2015 = vadd.f32 %v1927, %v2014
        %v2016 = vpop.f32.mrb[0].mxu0
        %2017 = vdwg.mxu0
        %v2018 = vadd.f32 %v1407, %v2012
        %v2019 = vadd.f32 %v1408, %v2015
        %v2020 = vld [vmem:[%s470 + $0x8] sm:$0x1]
        %v2021 = vld [vmem:[%s470 + $0x9] sm:$0x1]
        %2022 = vadd.xlane.f32.xlu0 %v2018
        %v2023 = vpop.xlane.xlu0 %2022
        %2024 = vadd.xlane.f32.xlu0 %v2019
        %v2025 = vpop.xlane.xlu0 %2024
        %v2026 = vmul.f32 %v2023, %v1374
        %v2027 = vmul.f32 %v2025, %v1374
        %v2028 = vsub.f32 %v2018, %v2026
        %v2029 = vsub.f32 %v2019, %v2027
        %v2030 = vmul.f32 %v2028, %v2028
        %v2031 = vmul.f32 %v2029, %v2029
        %2032 = vadd.xlane.f32.xlu0 %v2030
        %v2033 = vpop.xlane.xlu0 %2032
        %2034 = vadd.xlane.f32.xlu0 %v2031
        %v2035 = vpop.xlane.xlu0 %2034
        %v2036 = vmul.f32 %v2033, %v1374
        %v2037 = vmul.f32 %v2035, %v1374
        %v2038 = vadd.f32 %v2036, 1e-06
        %v2039 = vadd.f32 %v2037, 1e-06
        %v2040 = vrsqrt.pop %v2038
        %v2041 = vrsqrt.pop %v2039
        %v2042 = vmul.f32 %v2028, %v2040
        %v2043 = vmul.f32 %v2029, %v2041
        %v2045 = vlaneseq
        %v2046 = vshrl.u32 %v2045, 7
        %v2047 = vsub.s32 0, %v2046
        %v2048 = vrot.slane %v2020, %v2047
        %v2050 = vmul.f32 %v2042, %v2048
        %v2051 = vmul.f32 %v2043, %v2048
        %v2053 = vlaneseq
        %v2054 = vshrl.u32 %v2053, 7
        %v2055 = vsub.s32 0, %v2054
        %v2056 = vrot.slane %v2021, %v2055
        %v2058 = vadd.f32 %v2050, %v2056
        %v2059 = vadd.f32 %v2051, %v2056
        %v2060 = vld [vmem:[%s452 + $0x18] sm:$0xff]
        %v2061 = vld [vmem:[%s452 + $0x38] sm:$0xff]
        %v2062 = vld [vmem:[%s452 + $0x58] sm:$0xff]
        %v2063 = vld [vmem:[%s452 + $0x78] sm:$0xff]
        %v2064 = vld [vmem:[%s452 + $0x98] sm:$0xff]
        %v2065 = vld [vmem:[%s452 + $0xb8] sm:$0xff]
        %v2066 = vld [vmem:[%s452 + $0xd8] sm:$0xff]
        %v2067 = vld [vmem:[%s452 + $0xf8] sm:$0xff]
        %v2068 = vld [vmem:[%s452 + $0x118] sm:$0xff]
        %v2069 = vld [vmem:[%s452 + $0x138] sm:$0xff]
        %v2070 = vld [vmem:[%s452 + $0x158] sm:$0xff]
        %v2071 = vld [vmem:[%s452 + $0x178] sm:$0xff]
        %v2072 = vld [vmem:[%s452 + $0x198] sm:$0xff]
        %v2073 = vld [vmem:[%s452 + $0x1b8] sm:$0xff]
        %v2074 = vld [vmem:[%s452 + $0x1d8] sm:$0xff]
        %v2075 = vld [vmem:[%s452 + $0x1f8] sm:$0xff]
        %v2076 = vpack.c.bf16 %v2059, %v2058
        %v2077 = vld [vmem:[%s470 + $0xa] sm:$0x3]
        %v2079 = vlaneseq
        %v2080 = vshrl.u32 %v2079, 7
        %v2081 = vsub.s32 0, %v2080
        %v2082 = vrot.slane %v2077, %v2081
        %v2083 = vlaneseq
        %v2084 = vshrl.u32 %v2083, 7
        %v2085 = vsub.s32 1, %v2084
        %v2086 = vrot.slane %v2077, %v2085
        %v2105 = vunpack.c.l.b16 %v2060
        %v2106 = vunpack.c.h.b16 %v2060
        %v2107 = vunpack.c.l.b16 %v2061
        %v2108 = vunpack.c.h.b16 %v2061
        %v2109 = vunpack.c.l.b16 %v2062
        %v2110 = vunpack.c.h.b16 %v2062
        %v2111 = vunpack.c.l.b16 %v2063
        %v2112 = vunpack.c.h.b16 %v2063
        %v2113 = vunpack.c.l.b16 %v2064
        %v2114 = vunpack.c.h.b16 %v2064
        %v2115 = vunpack.c.l.b16 %v2065
        %v2116 = vunpack.c.h.b16 %v2065
        %v2117 = vunpack.c.l.b16 %v2066
        %v2118 = vunpack.c.h.b16 %v2066
        %v2119 = vunpack.c.l.b16 %v2067
        %v2120 = vunpack.c.h.b16 %v2067
        %v2121 = vunpack.c.l.b16 %v2068
        %v2122 = vunpack.c.h.b16 %v2068
        %v2123 = vunpack.c.l.b16 %v2069
        %v2124 = vunpack.c.h.b16 %v2069
        %v2125 = vunpack.c.l.b16 %v2070
        %v2126 = vunpack.c.h.b16 %v2070
        %v2127 = vunpack.c.l.b16 %v2071
        %v2128 = vunpack.c.h.b16 %v2071
        %v2129 = vunpack.c.l.b16 %v2072
        %v2130 = vunpack.c.h.b16 %v2072
        %v2131 = vunpack.c.l.b16 %v2073
        %v2132 = vunpack.c.h.b16 %v2073
        %v2133 = vunpack.c.l.b16 %v2074
        %v2134 = vunpack.c.h.b16 %v2074
        %v2135 = vunpack.c.l.b16 %v2075
        %v2136 = vunpack.c.h.b16 %v2075
        %v2137 = vpack.c.b16 %v2107, %v2105
        %v2138 = vpack.c.b16 %v2108, %v2106
        %v2139 = vpack.c.b16 %v2111, %v2109
        %v2140 = vpack.c.b16 %v2112, %v2110
        %v2141 = vpack.c.b16 %v2115, %v2113
        %v2142 = vpack.c.b16 %v2116, %v2114
        %v2143 = vpack.c.b16 %v2119, %v2117
        %v2144 = vpack.c.b16 %v2120, %v2118
        %v2145 = vpack.c.b16 %v2123, %v2121
        %v2146 = vpack.c.b16 %v2124, %v2122
        %v2147 = vpack.c.b16 %v2127, %v2125
        %v2148 = vpack.c.b16 %v2128, %v2126
        %v2149 = vpack.c.b16 %v2131, %v2129
        %v2150 = vpack.c.b16 %v2132, %v2130
        %v2151 = vpack.c.b16 %v2135, %v2133
        %v2152 = vpack.c.b16 %v2136, %v2134
        %2169 = vmatprep.subr.bf16.mxu0 %v2138
        %2170 = vmatpush1.bf16.msra.mxu0 %v2137
        %2171 = vmatprep.subr.bf16.mxu0 %v2140
        %2172 = vmatpush1.bf16.msra.mxu0 %v2139
        %2173 = vmatprep.subr.bf16.mxu0 %v2142
        %2174 = vmatpush1.bf16.msra.mxu0 %v2141
        %2175 = vmatprep.subr.bf16.mxu0 %v2144
        %2176 = vmatpush1.bf16.msra.mxu0 %v2143
        %2177 = vmatprep.subr.bf16.mxu0 %v2146
        %2178 = vmatpush1.bf16.msra.mxu0 %v2145
        %2179 = vmatprep.subr.bf16.mxu0 %v2148
        %2180 = vmatpush1.bf16.msra.mxu0 %v2147
        %2181 = vmatprep.subr.bf16.mxu0 %v2150
        %2182 = vmatpush1.bf16.msra.mxu0 %v2149
        %2183 = vmatprep.subr.bf16.mxu0 %v2152
        %2184 = vmatpush1.bf16.msra.mxu0 %v2151
        %2185 = vmatprep.subr.bf16.mxu0 0
        %2186 = vmatpush1.bf16.msra.mxu0 0
        %2187 = vmatprep.subr.bf16.mxu0 0
        %2188 = vmatpush1.bf16.msra.mxu0 0
        %2189 = vmatprep.subr.bf16.mxu0 0
        %2190 = vmatpush1.bf16.msra.mxu0 0
        %2191 = vmatprep.subr.bf16.mxu0 0
        %2192 = vmatpush1.bf16.msra.mxu0 0
        %2193 = vmatprep.subr.bf16.mxu0 0
        %2194 = vmatpush1.bf16.msra.mxu0 0
        %2195 = vmatprep.subr.bf16.mxu0 0
        %2196 = vmatpush1.bf16.msra.mxu0 0
        %2197 = vmatprep.subr.bf16.mxu0 0
        %2198 = vmatpush1.bf16.msra.mxu0 0
        %2199 = vmatprep.subr.bf16.mxu0 0
        %2200 = vmatpush1.bf16.msra.mxu0 0
        %2201 = vmatprep.mubr.bf16.mxu0 0
        %2202 = vmatmul.mubr.bf16.gmra.mrb[0].mxu0 %v2076
        %v2203 = vpop.f32.mrb[0].mxu0
        %v2204 = vadd.f32 %v2082, %v2203
        %v2205 = vpop.f32.mrb[0].mxu0
        %v2206 = vadd.f32 %v2086, %v2205
        %v2207 = vpop.f32.mrb[0].mxu0
        %v2208 = vadd.f32 %v2082, %v2207
        %v2209 = vpop.f32.mrb[0].mxu0
        %v2210 = vadd.f32 %v2086, %v2209
        %2211 = vdwg.mxu0
        %v2212 = vmax.f32 %v2204, 0.0
        %v2213 = vmax.f32 %v2206, 0.0
        %v2214 = vmax.f32 %v2208, 0.0
        %v2215 = vmax.f32 %v2210, 0.0
        %v2216 = vld [vmem:[%s461] sm:$0xf]
        %v2217 = vld [vmem:[%s461 + $0x4] sm:$0xf]
        %v2218 = vld [vmem:[%s461 + $0x8] sm:$0xf]
        %v2219 = vld [vmem:[%s461 + $0xc] sm:$0xf]
        %v2220 = vld [vmem:[%s461 + $0x10] sm:$0xf]
        %v2221 = vld [vmem:[%s461 + $0x14] sm:$0xf]
        %v2222 = vld [vmem:[%s461 + $0x18] sm:$0xf]
        %v2223 = vld [vmem:[%s461 + $0x1c] sm:$0xf]
        %v2224 = vld [vmem:[%s461 + $0x20] sm:$0xf]
        %v2225 = vld [vmem:[%s461 + $0x24] sm:$0xf]
        %v2226 = vld [vmem:[%s461 + $0x28] sm:$0xf]
        %v2227 = vld [vmem:[%s461 + $0x2c] sm:$0xf]
        %v2228 = vld [vmem:[%s461 + $0x30] sm:$0xf]
        %v2229 = vld [vmem:[%s461 + $0x34] sm:$0xf]
        %v2230 = vld [vmem:[%s461 + $0x38] sm:$0xf]
        %v2231 = vld [vmem:[%s461 + $0x3c] sm:$0xf]
        %v2232 = vld [vmem:[%s461 + $0x40] sm:$0xf]
        %v2233 = vld [vmem:[%s461 + $0x44] sm:$0xf]
        %v2234 = vld [vmem:[%s461 + $0x48] sm:$0xf]
        %v2235 = vld [vmem:[%s461 + $0x4c] sm:$0xf]
        %v2236 = vld [vmem:[%s461 + $0x50] sm:$0xf]
        %v2237 = vld [vmem:[%s461 + $0x54] sm:$0xf]
        %v2238 = vld [vmem:[%s461 + $0x58] sm:$0xf]
        %v2239 = vld [vmem:[%s461 + $0x5c] sm:$0xf]
        %v2240 = vld [vmem:[%s461 + $0x60] sm:$0xf]
        %v2241 = vld [vmem:[%s461 + $0x64] sm:$0xf]
        %v2242 = vld [vmem:[%s461 + $0x68] sm:$0xf]
        %v2243 = vld [vmem:[%s461 + $0x6c] sm:$0xf]
        %v2244 = vld [vmem:[%s461 + $0x70] sm:$0xf]
        %v2245 = vld [vmem:[%s461 + $0x74] sm:$0xf]
        %v2246 = vld [vmem:[%s461 + $0x78] sm:$0xf]
        %v2247 = vld [vmem:[%s461 + $0x7c] sm:$0xf]
        %v2248 = vpack.c.bf16 %v2214, %v2212
        %v2249 = vpack.c.bf16 %v2215, %v2213
        %v2250 = vld [vmem:[%s470 + $0xc] sm:$0x1]
        %v2252 = vlaneseq
        %v2253 = vshrl.u32 %v2252, 7
        %v2254 = vsub.s32 0, %v2253
        %v2255 = vrot.slane %v2250, %v2254
        %v2289 = vunpack.c.l.b16 %v2216
        %v2290 = vunpack.c.l.b16 %v2217
        %v2291 = vunpack.c.l.b16 %v2218
        %v2292 = vunpack.c.l.b16 %v2219
        %v2293 = vunpack.c.l.b16 %v2220
        %v2294 = vunpack.c.l.b16 %v2221
        %v2295 = vunpack.c.l.b16 %v2222
        %v2296 = vunpack.c.l.b16 %v2223
        %v2297 = vunpack.c.l.b16 %v2224
        %v2298 = vunpack.c.l.b16 %v2225
        %v2299 = vunpack.c.l.b16 %v2226
        %v2300 = vunpack.c.l.b16 %v2227
        %v2301 = vunpack.c.l.b16 %v2228
        %v2302 = vunpack.c.l.b16 %v2229
        %v2303 = vunpack.c.l.b16 %v2230
        %v2304 = vunpack.c.l.b16 %v2231
        %v2305 = vunpack.c.l.b16 %v2232
        %v2306 = vunpack.c.l.b16 %v2233
        %v2307 = vunpack.c.l.b16 %v2234
        %v2308 = vunpack.c.l.b16 %v2235
        %v2309 = vunpack.c.l.b16 %v2236
        %v2310 = vunpack.c.l.b16 %v2237
        %v2311 = vunpack.c.l.b16 %v2238
        %v2312 = vunpack.c.l.b16 %v2239
        %v2313 = vunpack.c.l.b16 %v2240
        %v2314 = vunpack.c.l.b16 %v2241
        %v2315 = vunpack.c.l.b16 %v2242
        %v2316 = vunpack.c.l.b16 %v2243
        %v2317 = vunpack.c.l.b16 %v2244
        %v2318 = vunpack.c.l.b16 %v2245
        %v2319 = vunpack.c.l.b16 %v2246
        %v2320 = vunpack.c.l.b16 %v2247
        %v2321 = vpack.c.b16 %v2290, %v2289
        %v2322 = vpack.c.b16 %v2292, %v2291
        %v2323 = vpack.c.b16 %v2294, %v2293
        %v2324 = vpack.c.b16 %v2296, %v2295
        %v2325 = vpack.c.b16 %v2298, %v2297
        %v2326 = vpack.c.b16 %v2300, %v2299
        %v2327 = vpack.c.b16 %v2302, %v2301
        %v2328 = vpack.c.b16 %v2304, %v2303
        %v2329 = vpack.c.b16 %v2306, %v2305
        %v2330 = vpack.c.b16 %v2308, %v2307
        %v2331 = vpack.c.b16 %v2310, %v2309
        %v2332 = vpack.c.b16 %v2312, %v2311
        %v2333 = vpack.c.b16 %v2314, %v2313
        %v2334 = vpack.c.b16 %v2316, %v2315
        %v2335 = vpack.c.b16 %v2318, %v2317
        %v2336 = vpack.c.b16 %v2320, %v2319
        %2353 = vmatprep.subr.bf16.mxu0 0
        %2354 = vmatpush1.bf16.msra.mxu0 %v2321
        %2355 = vmatprep.subr.bf16.mxu0 0
        %2356 = vmatpush1.bf16.msra.mxu0 %v2322
        %2357 = vmatprep.subr.bf16.mxu0 0
        %2358 = vmatpush1.bf16.msra.mxu0 %v2323
        %2359 = vmatprep.subr.bf16.mxu0 0
        %2360 = vmatpush1.bf16.msra.mxu0 %v2324
        %2361 = vmatprep.subr.bf16.mxu0 0
        %2362 = vmatpush1.bf16.msra.mxu0 %v2325
        %2363 = vmatprep.subr.bf16.mxu0 0
        %2364 = vmatpush1.bf16.msra.mxu0 %v2326
        %2365 = vmatprep.subr.bf16.mxu0 0
        %2366 = vmatpush1.bf16.msra.mxu0 %v2327
        %2367 = vmatprep.subr.bf16.mxu0 0
        %2368 = vmatpush1.bf16.msra.mxu0 %v2328
        %2369 = vmatprep.subr.bf16.mxu0 0
        %2370 = vmatpush1.bf16.msra.mxu0 %v2329
        %2371 = vmatprep.subr.bf16.mxu0 0
        %2372 = vmatpush1.bf16.msra.mxu0 %v2330
        %2373 = vmatprep.subr.bf16.mxu0 0
        %2374 = vmatpush1.bf16.msra.mxu0 %v2331
        %2375 = vmatprep.subr.bf16.mxu0 0
        %2376 = vmatpush1.bf16.msra.mxu0 %v2332
        %2377 = vmatprep.subr.bf16.mxu0 0
        %2378 = vmatpush1.bf16.msra.mxu0 %v2333
        %2379 = vmatprep.subr.bf16.mxu0 0
        %2380 = vmatpush1.bf16.msra.mxu0 %v2334
        %2381 = vmatprep.subr.bf16.mxu0 0
        %2382 = vmatpush1.bf16.msra.mxu0 %v2335
        %2383 = vmatprep.subr.bf16.mxu0 0
        %2384 = vmatpush1.bf16.msra.mxu0 %v2336
        %2385 = vmatprep.mubr.bf16.mxu0 %v2249
        %2386 = vmatmul.mubr.bf16.gmra.mrb[0].mxu0 %v2248
        %v2387 = vpop.f32.mrb[0].mxu0
        %v2388 = vadd.f32 %v2255, %v2387
        %v2389 = vpop.f32.mrb[0].mxu0
        %v2390 = vpop.f32.mrb[0].mxu0
        %v2391 = vadd.f32 %v2255, %v2390
        %v2392 = vpop.f32.mrb[0].mxu0
        %2393 = vdwg.mxu0
        %v2394 = vadd.f32 %v2058, %v2388
        %v2395 = vadd.f32 %v2059, %v2391
        %v2396 = vld [vmem:[%s470 + $0xd] sm:$0x1]
        %v2397 = vld [vmem:[%s470 + $0xe] sm:$0x1]
        %2398 = vadd.xlane.f32.xlu0 %v2394
        %v2399 = vpop.xlane.xlu0 %2398
        %2400 = vadd.xlane.f32.xlu0 %v2395
        %v2401 = vpop.xlane.xlu0 %2400
        %v2402 = vmul.f32 %v2399, %v1374
        %v2403 = vmul.f32 %v2401, %v1374
        %v2404 = vsub.f32 %v2394, %v2402
        %v2405 = vsub.f32 %v2395, %v2403
        %v2406 = vmul.f32 %v2404, %v2404
        %v2407 = vmul.f32 %v2405, %v2405
        %2408 = vadd.xlane.f32.xlu0 %v2406
        %v2409 = vpop.xlane.xlu0 %2408
        %2410 = vadd.xlane.f32.xlu0 %v2407
        %v2411 = vpop.xlane.xlu0 %2410
        %v2412 = vmul.f32 %v2409, %v1374
        %v2413 = vmul.f32 %v2411, %v1374
        %v2414 = vadd.f32 %v2412, 1e-06
        %v2415 = vadd.f32 %v2413, 1e-06
        %v2416 = vrsqrt.pop %v2414
        %v2417 = vrsqrt.pop %v2415
        %v2418 = vmul.f32 %v2404, %v2416
        %v2419 = vmul.f32 %v2405, %v2417
        %v2421 = vlaneseq
        %v2422 = vshrl.u32 %v2421, 7
        %v2423 = vsub.s32 0, %v2422
        %v2424 = vrot.slane %v2396, %v2423
        %v2426 = vmul.f32 %v2418, %v2424
        %v2427 = vmul.f32 %v2419, %v2424
        %v2429 = vlaneseq
        %v2430 = vshrl.u32 %v2429, 7
        %v2431 = vsub.s32 0, %v2430
        %v2432 = vrot.slane %v2397, %v2431
        %v2434 = vadd.f32 %v2426, %v2432
        %v2435 = vadd.f32 %v2427, %v2432
        %2436 = vst [vmem:[#allocation17] sm:$0xff] %v2434
        %2437 = vst [vmem:[#allocation17 + $0x8] sm:$0xff] %v2435
        // Predicated region
        $region97: #{tpu_custom_call.1} parent=55 // pred_check
          %p2438 = pneg %p252
        $region98: #{tpu_custom_call.1} parent=55 // pred_check_branch
          %2440 = sbr.rel (%p2438) target = $region100
        $region99: #{tpu_custom_call.1} parent=55 // pred_region
          %s2442 = ssub.s32 256, 256
          %2443 = vsyncadd [#allocation4], %s2442
          %s2444 = sshll.u32 [#allocation17], 4
          %s2445 = int_to_ptr.vmem [resolvable:$true] %s2444
          %2450 = dma.vmem_to_hbm [thread:$0]  %s2445, 256, %s9, [#allocation4], 128, 128, 8
        $region100: #{tpu_custom_call.1} parent=55 // pred_fallthru
          _
        // Predicated region
        $region101: #{tpu_custom_call.1} parent=55 // pred_check
          %p2451 = pneg %p252
        $region102: #{tpu_custom_call.1} parent=55 // pred_check_branch
          %2453 = sbr.rel (%p2451) target = $region104
        $region103: #{tpu_custom_call.1} parent=55 // pred_region
          %2454 = dma.done [#allocation4], 256
        $region104: #{tpu_custom_call.1} parent=55 // pred_fallthru
          _
      $region56: #{tpu_custom_call.1} parent=5 // pred_fallthru
        _
      %p2455 = scmp.le.s32.totalorder 2, %s25
      // Predicated region
      $region105: #{tpu_custom_call.1} parent=5 // pred_check
        %p2456 = pneg %p2455
      $region106: #{tpu_custom_call.1} parent=5 // pred_check_branch
        %2458 = sbr.rel (%p2456) target = $region108
      $region107: #{tpu_custom_call.1} parent=5 // pred_region
        %s2459 = ssub.s32 %s25, 2
      $region108: #{tpu_custom_call.1} parent=5 // pred_fallthru
        _
    $region6: #{tpu_custom_call.1} parent=1 // loop_footer
      %s29 = sadd.s32 1, %s25
    $region7: #{tpu_custom_call.1} parent=1 // loop_footer_branch
      %24 = sbr.rel target = $region3
    $region8: #{tpu_custom_call.1} parent=1 // loop_exit
      _
    %2460 = vsyncpa [#allocation3], 1
    %s2461 = scalar_lea.sflag [#allocation3], 1
    %2462 = vsyncpa %s2461, 1
    %2463 = vsyncpa [#allocation6], 1
    %2464 = vsyncpa [#allocation9], 1
    %2465 = vsyncpa [#allocation12], 1
    %s2466 = scalar_lea.sflag [#allocation12], 1
    %2467 = vsyncpa %s2466, 1
    %2468 = vsyncpa [#allocation15], 1
    %s2469 = scalar_lea.sflag [#allocation15], 1
    %2470 = vsyncpa %s2469, 1
    %2471 = vsyncpa [#allocation4], 1
    %s2472 = scalar_lea.sflag [#allocation4], 1
    %2473 = vsyncpa %s2472, 1

</llo_original>
